<compile_context>
chip_gen: v6e
topology: v6e:2x2x1
jax: 0.10.0
libtpu: 0.0.40
codegen_flags: <defaults>
</compile_context>

<pallas_src>
import functools

import jax
import jax.numpy as jnp
from jax.experimental import pallas as pl
from jax.experimental.pallas import tpu as pltpu


# ----------------------------------------------------------------------------
# Pallas kernel: one (h_block, cout_block) tile of a (K,1)/(S,1) Conv2d,
# fused with bias add and (optionally) LeakyReLU(0.2).
#
# The wrapper already deinterleaved the padded input by stride phase and
# attached the halo rows, so tap k reads TH *contiguous* rows of phase k%S at
# row offset k//S -> one (TH*N, C_in)@(C_in, CSUB) MXU matmul per tap.
# ----------------------------------------------------------------------------
def _conv_blocks_kernel(x_ref, w_ref, b_ref, o_ref, *, stride, ksize, th, csub,
                        apply_act):
    # x_ref: (n_phase, TH + qmax, N, C_in)  bf16, phase-major, halo attached
    # w_ref: (ksize, C_in, TCo)             bf16
    # b_ref: (1, TCo)                       f32
    # o_ref: (TH, N, TCo)                   bf16
    n = x_ref.shape[2]
    c_in = x_ref.shape[3]
    tco = o_ref.shape[2]
    m = th * n

    # Load each tap's contiguous (TH, N, C_in) slab once; reuse across the
    # C_out sub-tiles.  (th, N, C) -> (th*N, C) only merges leading dims.
    xs = [x_ref[k % stride, pl.ds(k // stride, th)].reshape(m, c_in)
          for k in range(ksize)]

    # Bounded f32 accumulator: <=256-wide C_out sub-tiles (v5e/v6e MRF + vst
    # pressure; neutral on v7x's MRB).
    for c0 in range(0, tco, csub):
        acc = jnp.zeros((m, csub), jnp.float32)
        for k in range(ksize):
            acc = acc + jnp.dot(xs[k], w_ref[k, :, pl.ds(c0, csub)],
                                preferred_element_type=jnp.float32)
        acc = acc + b_ref[:, pl.ds(c0, csub)]
        if apply_act:
            acc = jnp.where(acc > 0, acc, 0.2 * acc)        # leaky_relu(0.2)
        o_ref[:, :, pl.ds(c0, csub)] = acc.astype(o_ref.dtype).reshape(th, n, csub)


# ----------------------------------------------------------------------------
# Tiling / wrapper-side data staging
# ----------------------------------------------------------------------------
def _pick_tiles(h_out, n, c_in_eff, c_out, ksize_eff, qmax, n_phase):
    """Balanced output-row tiling and C_out tiling under a VMEM budget that is
    safe on v5e/v6e (128 MiB physical) and v7x (64 MiB physical)."""
    dtype_bytes = 2                      # bf16 activations/weights
    tco = min(c_out, 512)
    th = max(1, pl.cdiv(512, n))         # target >= ~512 MXU rows per step
    th = min(th, 256, h_out)

    def step_bytes(th_, tco_):
        x_blk = n_phase * (th_ + qmax) * n * c_in_eff * dtype_bytes * 2   # dbl buf
        w_blk = ksize_eff * c_in_eff * tco_ * dtype_bytes * 2             # worst case
        o_blk = th_ * n * tco_ * dtype_bytes * 2
        scratch = (th_ * n * min(tco_, 256) * 4                           # f32 acc
                   + ksize_eff * th_ * n * c_in_eff * dtype_bytes)        # tap slabs
        return x_blk + w_blk + o_blk + scratch

    budget = 40 << 20
    while th > 1 and step_bytes(th, tco) > budget:
        th = max(1, th // 2)
    while tco > 128 and step_bytes(th, tco) > budget:
        tco //= 2
    assert c_out % tco == 0, (c_out, tco)

    n_h = pl.cdiv(h_out, th)
    th = pl.cdiv(h_out, n_h)             # balanced: waste <= n_h - 1 rows
    return th, n_h, tco, step_bytes(th, tco)


def _pad_rows(x, pad, h_buf):
    """Top zero-pad of `pad` rows; bottom zero-pad/trim to exactly h_buf rows."""
    h_in = x.shape[0]
    x_pad = jnp.pad(x, ((pad, max(h_buf - pad - h_in, 0)), (0, 0), (0, 0)))
    return x_pad[:h_buf]


def _build_phase_blocks(x, *, ksize, stride, pad, n_h, th):
    """(H_in, N, C) -> (n_h*S, TH+qmax, N, C): padded input deinterleaved by
    stride phase, split into overlapping per-block windows (halo attached)."""
    _, n, c = x.shape
    qmax = (ksize - 1) // stride
    m_rows = n_h * th + qmax                         # rows per phase
    x_pad = _pad_rows(x, pad, m_rows * stride)
    xp = x_pad.reshape(m_rows, stride, n, c)         # [m, p] = padded row m*S+p
    idx = (jnp.arange(n_h, dtype=jnp.int32)[:, None] * th
           + jnp.arange(th + qmax, dtype=jnp.int32)[None, :])
    blk = xp[idx]                                    # (n_h, TH+qmax, S, N, C)
    blk = jnp.transpose(blk, (0, 2, 1, 3, 4))        # (n_h, S, TH+qmax, N, C)
    return blk.reshape(n_h * stride, th + qmax, n, c)


def _build_im2col_blocks(x, *, ksize, stride, pad, n_h, th):
    """(H_in, N, C) -> (n_h, TH, N, K*C): K taps folded into the channel dim."""
    _, n, c = x.shape
    ht = n_h * th
    x_pad = _pad_rows(x, pad, (ht - 1) * stride + ksize)
    rows = (jnp.arange(ht, dtype=jnp.int32)[:, None] * stride
            + jnp.arange(ksize, dtype=jnp.int32)[None, :])
    col = x_pad[rows]                                # (HT, K, N, C)
    col = jnp.transpose(col, (0, 2, 1, 3))           # (HT, N, K, C)
    return col.reshape(n_h, th, n, ksize * c)        # channel index = k*C + c


_WEIGHT_SINGLE_BUFFER_OK = [True]   # flipped to False if pl.Buffered(1) rejected


def _call_conv_pallas(kernel, x_blk, w_eff, bias2, *, grid, block_x, block_w,
                      block_b, block_o, out_shape, vmem_limit):
    def run(single_buffer_weights):
        # Weight/bias block index only changes on the outer co axis; single
        # buffering them saves up to ~5 MiB VMEM on the deep layers.
        wkw = {"pipeline_mode": pl.Buffered(1)} if single_buffer_weights else {}
        in_specs = [
            pl.BlockSpec(block_x, lambda co, hb: (hb, 0, 0, 0)),
            pl.BlockSpec(block_w, lambda co, hb: (0, 0, co), **wkw),
            pl.BlockSpec(block_b, lambda co, hb: (0, co), **wkw),
        ]
        out_specs = pl.BlockSpec(block_o, lambda co, hb: (hb, 0, co))
        return pl.pallas_call(
            kernel,
            out_shape=out_shape,
            grid_spec=pltpu.PrefetchScalarGridSpec(
                num_scalar_prefetch=0,
                grid=grid,                 # (n_co, n_h): h innermost -> the
                in_specs=in_specs,         # weight tile stays resident
                out_specs=out_specs,
            ),
            compiler_params=pltpu.CompilerParams(
                # Every (co, hb) output tile is independent -> megacore-safe.
                dimension_semantics=("parallel", "parallel"),
                # Default scoped VMEM is ~16 MiB (v5e) / ~32 MiB (v6e, v7x);
                # pass an explicit, estimate-derived limit with headroom.
                vmem_limit_bytes=vmem_limit,
            ),
        )(x_blk, w_eff, bias2)

    if _WEIGHT_SINGLE_BUFFER_OK[0]:
        try:
            return run(True)
        except Exception:                  # pl.Buffered(1) unsupported -> fallback
            _WEIGHT_SINGLE_BUFFER_OK[0] = False
    return run(False)


def conv2d_kx1(x, w_knc, bias, *, stride, pad, apply_act=True):
    """(K,1)-kernel / (S,1)-stride Conv2d + bias + leaky_relu(0.2) on the MXU.

    x:     (H_in, N, C_in)   bf16
    w_knc: (K, C_in, C_out)  bf16
    bias:  (1, C_out)        f32
    Returns (H_out, N, C_out) bf16 with H_out = (H_in + 2*pad - K)//S + 1.
    """
    h_in, n, c_in = x.shape
    ksize, _, c_out = w_knc.shape
    h_out = (h_in + 2 * pad - ksize) // stride + 1
    assert h_out >= 1

    # Small-C_in layers: fold the K taps into the contraction dim (im2col) so
    # the MXU sees one (TH*N, K*C_in) matmul instead of K thin ones.
    fold_taps = ksize * c_in <= 256
    if fold_taps:
        c_in_eff, ksize_eff, stride_eff, n_phase, qmax = ksize * c_in, 1, 1, 1, 0
        w_eff = w_knc.reshape(1, c_in_eff, c_out)
    else:
        c_in_eff, ksize_eff, stride_eff, n_phase = c_in, ksize, stride, stride
        qmax = (ksize - 1) // stride
        w_eff = w_knc

    th, n_h, tco, est_bytes = _pick_tiles(
        h_out, n, c_in_eff, c_out, ksize_eff, qmax, n_phase)
    n_co = c_out // tco
    csub = min(256, tco)

    if fold_taps:
        x_blk = _build_im2col_blocks(x, ksize=ksize, stride=stride, pad=pad,
                                     n_h=n_h, th=th)
    else:
        x_blk = _build_phase_blocks(x, ksize=ksize, stride=stride, pad=pad,
                                    n_h=n_h, th=th)

    kernel = functools.partial(_conv_blocks_kernel, stride=stride_eff,
                               ksize=ksize_eff, th=th, csub=csub,
                               apply_act=apply_act)
    vmem_limit = int(min(48 << 20, max(24 << 20, 2 * est_bytes)))
    out = _call_conv_pallas(
        kernel, x_blk, w_eff, bias,
        grid=(n_co, n_h),
        block_x=(n_phase, th + qmax, n, c_in_eff),
        block_w=(ksize_eff, c_in_eff, tco),
        block_b=(1, tco),
        block_o=(th, n, tco),
        out_shape=jax.ShapeDtypeStruct((n_h * th, n, c_out), x.dtype),
        vmem_limit=vmem_limit)
    return out[:h_out]


# ----------------------------------------------------------------------------
# DiscriminatorP forward (Pallas-backed for the C>=32 layers)
# ----------------------------------------------------------------------------
def prepare_params(params):
    """One-time parameter preprocessing (weight_norm already folded at init):
    Pallas-layer weights -> (K, C_in, C_out) bf16, biases -> (1, C_out) f32,
    so no per-forward relayout/cast HBM traffic is needed."""
    first, last = params[0], params[-1]
    mid = []
    for w, b, stride, pad in params[1:-1]:
        w_knc = jnp.transpose(w[:, :, :, 0], (2, 1, 0)).astype(jnp.bfloat16)
        mid.append((w_knc, b.reshape(1, -1).astype(jnp.float32), stride, pad))
    return first, mid, last


def discriminator_p_forward(x, prepped, period):
    """x: (B, 1, T) f32.  prepped = prepare_params(params).

    Returns (flattened_logits, fmap) matching DiscriminatorP.forward,
    with fmap entries in NCHW layout (f32)."""
    (w0, b0, s0, p0), mid, (wp, bp, sp, pp) = prepped
    b, c, t = x.shape
    if t % period != 0:
        n_pad = period - t % period
        x = jnp.pad(x, ((0, 0), (0, 0), (0, n_pad)), mode="reflect")
    xv = x.reshape(b, c, -1, period)                 # (B, 1, H, P)

    fmap = []

    # Layer 1 (C_in=1): per-tap outer product, negligible MXU work -> XLA conv.
    y = jax.lax.conv_general_dilated(
        xv, w0, window_strides=(s0, 1), padding=((p0, p0), (0, 0)),
        dimension_numbers=("NCHW", "OIHW", "NCHW")) + b0.reshape(1, -1, 1, 1)
    y = jnp.where(y > 0, y, 0.2 * y)
    fmap.append(y)

    # NCHW -> (H, N=B*P, C) with channels on the lane axis; bf16 for the MXU.
    h = jnp.transpose(y, (2, 0, 3, 1)).reshape(y.shape[2], b * period, -1)
    h = h.astype(jnp.bfloat16)

    # Layers 2..5: Pallas kernel (conv + bias + leaky_relu fused, bf16 MXU).
    for w_knc, bias, stride, pad in mid:
        h = conv2d_kx1(h, w_knc, bias, stride=stride, pad=pad, apply_act=True)
        # TODO(synk): the per-layer NCHW+f32 fmap materialization could be
        # deferred/batched if downstream consumers tolerate (H,N,C) bf16.
        y = jnp.transpose(h.reshape(h.shape[0], b, period, -1),
                          (1, 3, 0, 2)).astype(jnp.float32)   # NCHW fmap entry
        fmap.append(y)

    # conv_post (C_out=1): lane-width-1 output -> plain XLA conv.
    y = jax.lax.conv_general_dilated(
        y, wp, window_strides=(sp, 1), padding=((pp, pp), (0, 0)),
        dimension_numbers=("NCHW", "OIHW", "NCHW")) + bp.reshape(1, -1, 1, 1)
    fmap.append(y)

    return y.reshape(b, -1), fmap


# ----------------------------------------------------------------------------
# Pure-JAX reference (lax.conv), dtype-matched to the implementation
# ----------------------------------------------------------------------------
def reference_forward(x, params, period):
    b, c, t = x.shape
    if t % period != 0:
        n_pad = period - t % period
        x = jnp.pad(x, ((0, 0), (0, 0), (0, n_pad)), mode="reflect")
    x = x.reshape(b, c, -1, period)
    fmap = []
    n_layers = len(params)
    for i, (w, bias, stride, pad) in enumerate(params):
        lhs, rhs = x, w
        if 0 < i < n_layers - 1:   # Pallas layers run in bf16 with f32 accum
            lhs, rhs = x.astype(jnp.bfloat16), w.astype(jnp.bfloat16)
        x = jax.lax.conv_general_dilated(
            lhs, rhs, window_strides=(stride, 1), padding=((pad, pad), (0, 0)),
            dimension_numbers=("NCHW", "OIHW", "NCHW"),
            preferred_element_type=jnp.float32) + bias.reshape(1, -1, 1, 1)
        if i < n_layers - 1:
            x = jnp.where(x > 0, x, 0.2 * x)
        fmap.append(x)
    return x.reshape(b, -1), fmap


# ----------------------------------------------------------------------------
# Deterministic parameter init (weight_norm at init == plain conv weight)
# ----------------------------------------------------------------------------
def make_params(key, kernel_size=5, stride=3):
    in_chs = [1, 32, 128, 512, 1024]
    out_chs = [32, 128, 512, 1024, 1024]
    pad = (kernel_size - 1) // 2  # get_padding(kernel_size, 1)
    params = []
    for cin, cout in zip(in_chs, out_chs):
        key, kw, kb = jax.random.split(key, 3)
        scale = 1.0 / jnp.sqrt(cin * kernel_size)
        w = scale * jax.random.normal(kw, (cout, cin, kernel_size, 1), jnp.float32)
        b = 0.01 * jax.random.normal(kb, (cout,), jnp.float32)
        params.append((w, b, stride, pad))
    # conv_post: Conv2d(1024, 1, (3,1), 1, padding=(1,0))
    key, kw, kb = jax.random.split(key, 3)
    scale = 1.0 / jnp.sqrt(1024 * 3)
    w = scale * jax.random.normal(kw, (1, 1024, 3, 1), jnp.float32)
    b = 0.01 * jax.random.normal(kb, (1,), jnp.float32)
    params.append((w, b, 1, 1))
    return params


if __name__ == "__main__":
    key = jax.random.PRNGKey(0)
    key, kx = jax.random.split(key)

    period = 2
    # T % period != 0 exercises the reflect-pad branch; T large enough that
    # layer 2 uses multiple H blocks (halo across a block boundary) and the
    # deep layers exercise the C_out tiling.
    B, C, T = 4, 1, 1199
    x = jax.random.normal(kx, (B, C, T), jnp.float32)

    params = make_params(key)
    prepped = prepare_params(params)          # one-time weight relayout/cast

    out, fmap = discriminator_p_forward(x, prepped, period)
    out = jax.block_until_ready(out)
    fmap = [jax.block_until_ready(f) for f in fmap]

    ref_out, ref_fmap = reference_forward(x, params, period)

    assert out.shape == ref_out.shape, (out.shape, ref_out.shape)
    assert jnp.allclose(out, ref_out, atol=2e-2, rtol=2e-2), float(
        jnp.max(jnp.abs(out - ref_out)))
    for f, rf in zip(fmap, ref_fmap):
        assert f.shape == rf.shape, (f.shape, rf.shape)
        assert jnp.allclose(f, rf, atol=2e-2, rtol=2e-2), float(
            jnp.max(jnp.abs(f - rf)))

    print("KERNEL_OK")
</pallas_src>

<mosaic_0001>
module attributes {stable_mosaic.version = 11 : i64} {
  func.func @_conv_blocks_kernel(%arg0: i32, %arg1: i32, %arg2: memref<1x34x8x160xbf16, #tpu.memory_space<vmem>>, %arg3: memref<1x160x128xbf16, #tpu.memory_space<vmem>>, %arg4: memref<1x128xf32, #tpu.memory_space<vmem>>, %arg5: memref<34x8x128xbf16, #tpu.memory_space<vmem>>) attributes {dimension_semantics = [#tpu.dimension_semantics<parallel>, #tpu.dimension_semantics<parallel>], iteration_bounds = array<i64: 1, 2>, scalar_prefetch = 0 : i64, scratch_operands = 0 : i64, tpu.core_type = #tpu.core_type<tc>, window_params = [{transform_indices = @transform_0, window_bounds = array<i64: 1, 34, 8, 160>}, {pipeline_mode = #tpu.pipeline_mode<synchronous>, transform_indices = @transform_1, window_bounds = array<i64: 1, 160, 128>}, {pipeline_mode = #tpu.pipeline_mode<synchronous>, transform_indices = @transform_2, window_bounds = array<i64: 1, 128>}, {transform_indices = @transform_3, window_bounds = array<i64: 34, 8, 128>}]} {
    %c0 = arith.constant 0 : index
    %c0_0 = arith.constant 0 : index
    %c0_1 = arith.constant 0 : index
    %c0_2 = arith.constant 0 : index
    %0 = vector.load %arg2[%c0, %c0_0, %c0_1, %c0_2] : memref<1x34x8x160xbf16, #tpu.memory_space<vmem>>, vector<1x34x8x160xbf16>
    %1 = vector.shape_cast %0 : vector<1x34x8x160xbf16> to vector<34x8x160xbf16>
    %2 = vector.shape_cast %1 : vector<34x8x160xbf16> to vector<272x160xbf16>
    %cst = arith.constant 0.000000e+00 : f32
    %3 = vector.broadcast %cst : f32 to vector<272x128xf32>
    %c0_3 = arith.constant 0 : index
    %c0_4 = arith.constant 0 : index
    %c0_5 = arith.constant 0 : index
    %4 = vector.load %arg3[%c0_3, %c0_4, %c0_5] : memref<1x160x128xbf16, #tpu.memory_space<vmem>>, vector<1x160x128xbf16>
    %5 = vector.shape_cast %4 : vector<1x160x128xbf16> to vector<160x128xbf16>
    %cst_6 = arith.constant dense<0.000000e+00> : vector<272x128xf32>
    %6 = tpu.matmul %2, %5, %cst_6 {dimension_numbers = #tpu.dot_dimension_numbers<[1], [0], [0], [1], [0, 0, 1, 1], [], []>} : vector<272x160xbf16>, vector<160x128xbf16>, vector<272x128xf32> -> vector<272x128xf32>
    %7 = arith.addf %3, %6 : vector<272x128xf32>
    %c0_7 = arith.constant 0 : index
    %c0_8 = arith.constant 0 : index
    %8 = vector.load %arg4[%c0_7, %c0_8] : memref<1x128xf32, #tpu.memory_space<vmem>>, vector<1x128xf32>
    %9 = vector.broadcast %8 : vector<1x128xf32> to vector<272x128xf32>
    %10 = arith.addf %7, %9 : vector<272x128xf32>
    %cst_9 = arith.constant 0.000000e+00 : f32
    %11 = vector.broadcast %cst_9 : f32 to vector<272x128xf32>
    %12 = arith.cmpf ogt, %10, %11 : vector<272x128xf32>
    %cst_10 = arith.constant 2.000000e-01 : f32
    %13 = vector.broadcast %cst_10 : f32 to vector<272x128xf32>
    %14 = arith.mulf %13, %10 : vector<272x128xf32>
    %15 = arith.select %12, %10, %14 : vector<272x128xi1>, vector<272x128xf32>
    %16 = arith.truncf %15 : vector<272x128xf32> to vector<272x128xbf16>
    %17 = vector.shape_cast %16 : vector<272x128xbf16> to vector<34x8x128xbf16>
    %c0_11 = arith.constant 0 : index
    %c0_12 = arith.constant 0 : index
    %c0_13 = arith.constant 0 : index
    %18 = vector.load %arg5[%c0_11, %c0_12, %c0_13] : memref<34x8x128xbf16, #tpu.memory_space<vmem>>, vector<34x8x128xbf16>
    tpu.vector_store %arg5[%c0_11, %c0_12, %c0_13], %17 {strides = array<i32>} : memref<34x8x128xbf16, #tpu.memory_space<vmem>>, vector<34x8x128xbf16>,
    return
  }
  func.func @transform_0(%arg0: i32, %arg1: i32) -> (i32, i32, i32, i32) {
    %c0_i32 = arith.constant 0 : i32
    %c0_i32_0 = arith.constant 0 : i32
    %c0_i32_1 = arith.constant 0 : i32
    %c0_i32_2 = arith.constant 0 : i32
    return %arg1, %c0_i32, %c0_i32_0, %c0_i32_1 : i32, i32, i32, i32
  }
  func.func @transform_1(%arg0: i32, %arg1: i32) -> (i32, i32, i32) {
    %c0_i32 = arith.constant 0 : i32
    %c0_i32_0 = arith.constant 0 : i32
    %c0_i32_1 = arith.constant 0 : i32
    return %c0_i32, %c0_i32_0, %arg0 : i32, i32, i32
  }
  func.func @transform_2(%arg0: i32, %arg1: i32) -> (i32, i32) {
    %c0_i32 = arith.constant 0 : i32
    %c0_i32_0 = arith.constant 0 : i32
    return %c0_i32, %arg0 : i32, i32
  }
  func.func @transform_3(%arg0: i32, %arg1: i32) -> (i32, i32, i32) {
    %c0_i32 = arith.constant 0 : i32
    %c0_i32_0 = arith.constant 0 : i32
    return %arg1, %c0_i32, %arg0 : i32, i32, i32
  }
}

module attributes {stable_mosaic.version = 11 : i64} {
  func.func @_conv_blocks_kernel(%arg0: i32, %arg1: i32, %arg2: memref<1x34x8x160xbf16, #tpu.memory_space<vmem>>, %arg3: memref<1x160x128xbf16, #tpu.memory_space<vmem>>, %arg4: memref<1x128xf32, #tpu.memory_space<vmem>>, %arg5: memref<34x8x128xbf16, #tpu.memory_space<vmem>>) attributes {dimension_semantics = [#tpu.dimension_semantics<parallel>, #tpu.dimension_semantics<parallel>], iteration_bounds = array<i64: 1, 2>, scalar_prefetch = 0 : i64, scratch_operands = 0 : i64, tpu.core_type = #tpu.core_type<tc>, window_params = [{transform_indices = @transform_0, window_bounds = array<i64: 1, 34, 8, 160>}, {transform_indices = @transform_1, window_bounds = array<i64: 1, 160, 128>}, {transform_indices = @transform_2, window_bounds = array<i64: 1, 128>}, {transform_indices = @transform_3, window_bounds = array<i64: 34, 8, 128>}]} {
    %c0 = arith.constant 0 : index
    %c0_0 = arith.constant 0 : index
    %c0_1 = arith.constant 0 : index
    %c0_2 = arith.constant 0 : index
    %0 = vector.load %arg2[%c0, %c0_0, %c0_1, %c0_2] : memref<1x34x8x160xbf16, #tpu.memory_space<vmem>>, vector<1x34x8x160xbf16>
    %1 = vector.shape_cast %0 : vector<1x34x8x160xbf16> to vector<34x8x160xbf16>
    %2 = vector.shape_cast %1 : vector<34x8x160xbf16> to vector<272x160xbf16>
    %cst = arith.constant 0.000000e+00 : f32
    %3 = vector.broadcast %cst : f32 to vector<272x128xf32>
    %c0_3 = arith.constant 0 : index
    %c0_4 = arith.constant 0 : index
    %c0_5 = arith.constant 0 : index
    %4 = vector.load %arg3[%c0_3, %c0_4, %c0_5] : memref<1x160x128xbf16, #tpu.memory_space<vmem>>, vector<1x160x128xbf16>
    %5 = vector.shape_cast %4 : vector<1x160x128xbf16> to vector<160x128xbf16>
    %cst_6 = arith.constant dense<0.000000e+00> : vector<272x128xf32>
    %6 = tpu.matmul %2, %5, %cst_6 {dimension_numbers = #tpu.dot_dimension_numbers<[1], [0], [0], [1], [0, 0, 1, 1], [], []>} : vector<272x160xbf16>, vector<160x128xbf16>, vector<272x128xf32> -> vector<272x128xf32>
    %7 = arith.addf %3, %6 : vector<272x128xf32>
    %c0_7 = arith.constant 0 : index
    %c0_8 = arith.constant 0 : index
    %8 = vector.load %arg4[%c0_7, %c0_8] : memref<1x128xf32, #tpu.memory_space<vmem>>, vector<1x128xf32>
    %9 = vector.broadcast %8 : vector<1x128xf32> to vector<272x128xf32>
    %10 = arith.addf %7, %9 : vector<272x128xf32>
    %cst_9 = arith.constant 0.000000e+00 : f32
    %11 = vector.broadcast %cst_9 : f32 to vector<272x128xf32>
    %12 = arith.cmpf ogt, %10, %11 : vector<272x128xf32>
    %cst_10 = arith.constant 2.000000e-01 : f32
    %13 = vector.broadcast %cst_10 : f32 to vector<272x128xf32>
    %14 = arith.mulf %13, %10 : vector<272x128xf32>
    %15 = arith.select %12, %10, %14 : vector<272x128xi1>, vector<272x128xf32>
    %16 = arith.truncf %15 : vector<272x128xf32> to vector<272x128xbf16>
    %17 = vector.shape_cast %16 : vector<272x128xbf16> to vector<34x8x128xbf16>
    %c0_11 = arith.constant 0 : index
    %c0_12 = arith.constant 0 : index
    %c0_13 = arith.constant 0 : index
    %18 = vector.load %arg5[%c0_11, %c0_12, %c0_13] : memref<34x8x128xbf16, #tpu.memory_space<vmem>>, vector<34x8x128xbf16>
    tpu.vector_store %arg5[%c0_11, %c0_12, %c0_13], %17 {strides = array<i32>} : memref<34x8x128xbf16, #tpu.memory_space<vmem>>, vector<34x8x128xbf16>,
    return
  }
  func.func @transform_0(%arg0: i32, %arg1: i32) -> (i32, i32, i32, i32) {
    %c0_i32 = arith.constant 0 : i32
    %c0_i32_0 = arith.constant 0 : i32
    %c0_i32_1 = arith.constant 0 : i32
    %c0_i32_2 = arith.constant 0 : i32
    return %arg1, %c0_i32, %c0_i32_0, %c0_i32_1 : i32, i32, i32, i32
  }
  func.func @transform_1(%arg0: i32, %arg1: i32) -> (i32, i32, i32) {
    %c0_i32 = arith.constant 0 : i32
    %c0_i32_0 = arith.constant 0 : i32
    %c0_i32_1 = arith.constant 0 : i32
    return %c0_i32, %c0_i32_0, %arg0 : i32, i32, i32
  }
  func.func @transform_2(%arg0: i32, %arg1: i32) -> (i32, i32) {
    %c0_i32 = arith.constant 0 : i32
    %c0_i32_0 = arith.constant 0 : i32
    return %c0_i32, %arg0 : i32, i32
  }
  func.func @transform_3(%arg0: i32, %arg1: i32) -> (i32, i32, i32) {
    %c0_i32 = arith.constant 0 : i32
    %c0_i32_0 = arith.constant 0 : i32
    return %arg1, %c0_i32, %arg0 : i32, i32, i32
  }
}

</mosaic_0001>

<llo_original>
// kernel: tpu_custom_call.1
$region0: #{tpu_custom_call.1}
  #allocation0 [shape = 'u32[]', space=smem, size = 0x4, offset = 0x4, fixed_abs, tag = 'smem constant byte address 0x4 - core index']
  #allocation1 [shape = 'u32[144,128]{1,0:T(1,128)}', space=vmem, size = 0x12000, scoped, tag = 'internal scratch']
  %s0 = inlined_call_operand.hbm [shape: bf16[2,34,8,160], index: 0, kind: input, shape index: {}]
  %s1 = inlined_call_operand.hbm [shape: bf16[1,160,128], index: 1, kind: input, shape index: {}]
  %s2 = inlined_call_operand.vmem [shape: f32[1,128], index: 2, kind: input, shape index: {}]
  %s3 = inlined_call_operand.hbm [shape: bf16[68,8,128], index: 3, kind: output, shape index: {}]
  %s4 = sld [smem:[#allocation0]]
  $region53: #{tpu_custom_call.1} parent=0
    _
  %s6 = ssub.s32 1, %s4
  %s7 = scalar_select 0, %s6, %s4
  $region1: #{tpu_custom_call.1} parent=0
    #allocation2 [shape = 'u8[278528]{0}', space=vmem, size = 0x44000, scoped, tag = 'input window, operand 0']
    #allocation3 [shape = 's32[2]{0}', space=sflag, size = 0x8, scoped, tag = 'scoped memory for tpu_custom_call.1']
    #allocation4 [shape = 's32[2]{0}', space=sflag, size = 0x8, scoped, tag = 'scoped memory for tpu_custom_call.1']
    #allocation5 [shape = 'u8[40960]{0}', space=vmem, size = 0xa000, scoped, tag = 'input window, operand 1, single buffered']
    #allocation6 [shape = 's32[1]{0}', space=sflag, size = 0x4, scoped, tag = 'scoped memory for tpu_custom_call.1']
    #allocation7 [shape = 'u8[139264]{0}', space=vmem, size = 0x22000, scoped, tag = 'output window, operand 0']
    %8 = vsyncpa [#allocation3], 0
    %s9 = scalar_lea.sflag [#allocation3], 1
    %10 = vsyncpa %s9, 0
    %11 = vsyncpa [#allocation6], 0
    %12 = vsyncpa [#allocation4], 0
    %s13 = scalar_lea.sflag [#allocation4], 1
    %14 = vsyncpa %s13, 0
    loop: start=0, step=1, limit=4
    $region2: #{tpu_custom_call.1} parent=1 // loop_pre_header
      _
    $region3: #{tpu_custom_call.1} parent=1 // loop_header
      %s16 = sphi 0, %s20
      %p17 = scmp.ge.s32.totalorder %s16, 4
      %s23 = sphi 0, %s35
      %s24 = sphi 0, %s31
      %s25 = sphi 0, %s23
      %s26 = sphi 0, %s24
      %s27 = sphi 0, %s25
      %s28 = sphi 0, %s26
      %s38 = sphi 0, %s40
      %s41 = sphi 0, %s38
      %s42 = sphi 0, %s41
      %s58 = sphi 0, %s42
      %s64 = sphi 0, %s66
      %s67 = sphi 0, %s64
      %s68 = sphi 0, %s67
      %s84 = sphi 0, %s68
      %s90 = sphi 0, %s92
      %s93 = sphi 0, %s90
      %s94 = sphi 0, %s93
      %s110 = sphi 0, %s94
      %s118 = sphi 0, %s120
      %s121 = sphi 0, %s118
      %s122 = sphi 0, %s121
      %s138 = sphi 0, %s122
    $region4: #{tpu_custom_call.1} parent=1 // loop_header_branch
      %19 = sbr.rel (%p17) target = $region8
    $region5: #{tpu_custom_call.1} parent=1 // loop_body
      %s21 = ssub.s32 %s16, 1
      %s22 = ssub.s32 %s16, 2
      %s29 = sadd.s32 1, %s24
      %p30 = scmp.ge.s32.totalorder %s29, 2
      %s31 = scalar_select %p30, 0, %s29
      %s32 = sadd.s32 1, %s23
      %s33 = scalar_select %p30, %s32, %s23
      %p34 = scmp.ge.s32.totalorder %s33, 1
      %s35 = scalar_select %p34, 0, %s33
      %s36 = ssub.s32 %s24, %s31
      %p37 = scmp.eq.s32.totalorder %s36, 0
      %s39 = sadd.s32 %s38, 1
      %s40 = scalar_select %p37, %s38, %s39
      %p43 = pneg %p37
      %p44 = scmp.eq.s32.totalorder %s16, 1
      %p45 = por %p43, %p44
      %p46 = scmp.ne.s32.totalorder %s38, %s41
      %p47 = scmp.eq.s32.totalorder %s16, 0
      %p48 = por %p46, %p47
      %p49 = scmp.ne.s32.totalorder %s38, %s41
      %p50 = scmp.eq.s32.totalorder %s21, 1
      %p51 = por %p49, %p50
      %p52 = scmp.ne.s32.totalorder %s41, %s42
      %p53 = scmp.eq.s32.totalorder %s21, 0
      %p54 = por %p52, %p53
      %p55 = scmp.ne.s32.totalorder %s41, %s42
      %p56 = scmp.eq.s32.totalorder %s22, 1
      %p57 = por %p55, %p56
      %p59 = scmp.ne.s32.totalorder %s42, %s58
      %p60 = scmp.eq.s32.totalorder %s22, 0
      %p61 = por %p59, %p60
      %s62 = ssub.s32 %s23, %s35
      %p63 = scmp.eq.s32.totalorder %s62, 0
      %s65 = sadd.s32 %s64, 1
      %s66 = scalar_select %p63, %s64, %s65
      %p69 = pneg %p63
      %p70 = scmp.eq.s32.totalorder %s16, 1
      %p71 = por %p69, %p70
      %p72 = scmp.ne.s32.totalorder %s64, %s67
      %p73 = scmp.eq.s32.totalorder %s16, 0
      %p74 = por %p72, %p73
      %p75 = scmp.ne.s32.totalorder %s64, %s67
      %p76 = scmp.eq.s32.totalorder %s21, 1
      %p77 = por %p75, %p76
      %p78 = scmp.ne.s32.totalorder %s67, %s68
      %p79 = scmp.eq.s32.totalorder %s21, 0
      %p80 = por %p78, %p79
      %p81 = scmp.ne.s32.totalorder %s67, %s68
      %p82 = scmp.eq.s32.totalorder %s22, 1
      %p83 = por %p81, %p82
      %p85 = scmp.ne.s32.totalorder %s68, %s84
      %p86 = scmp.eq.s32.totalorder %s22, 0
      %p87 = por %p85, %p86
      %s88 = ssub.s32 %s23, %s35
      %p89 = scmp.eq.s32.totalorder %s88, 0
      %s91 = sadd.s32 %s90, 1
      %s92 = scalar_select %p89, %s90, %s91
      %p95 = pneg %p89
      %p96 = scmp.eq.s32.totalorder %s16, 1
      %p97 = por %p95, %p96
      %p98 = scmp.ne.s32.totalorder %s90, %s93
      %p99 = scmp.eq.s32.totalorder %s16, 0
      %p100 = por %p98, %p99
      %p101 = scmp.ne.s32.totalorder %s90, %s93
      %p102 = scmp.eq.s32.totalorder %s21, 1
      %p103 = por %p101, %p102
      %p104 = scmp.ne.s32.totalorder %s93, %s94
      %p105 = scmp.eq.s32.totalorder %s21, 0
      %p106 = por %p104, %p105
      %p107 = scmp.ne.s32.totalorder %s93, %s94
      %p108 = scmp.eq.s32.totalorder %s22, 1
      %p109 = por %p107, %p108
      %p111 = scmp.ne.s32.totalorder %s94, %s110
      %p112 = scmp.eq.s32.totalorder %s22, 0
      %p113 = por %p111, %p112
      %s114 = ssub.s32 %s24, %s31
      %s115 = ssub.s32 %s23, %s35
      %s116 = sor.u32 %s114, %s115
      %p117 = scmp.eq.s32.totalorder %s116, 0
      %s119 = sadd.s32 %s118, 1
      %s120 = scalar_select %p117, %s118, %s119
      %p123 = pneg %p117
      %p124 = scmp.eq.s32.totalorder %s16, 1
      %p125 = por %p123, %p124
      %p126 = scmp.ne.s32.totalorder %s118, %s121
      %p127 = scmp.eq.s32.totalorder %s16, 0
      %p128 = por %p126, %p127
      %p129 = scmp.ne.s32.totalorder %s118, %s121
      %p130 = scmp.eq.s32.totalorder %s21, 1
      %p131 = por %p129, %p130
      %p132 = scmp.ne.s32.totalorder %s121, %s122
      %p133 = scmp.eq.s32.totalorder %s21, 0
      %p134 = por %p132, %p133
      %p135 = scmp.ne.s32.totalorder %s121, %s122
      %p136 = scmp.eq.s32.totalorder %s22, 1
      %p137 = por %p135, %p136
      %p139 = scmp.ne.s32.totalorder %s122, %s138
      %p140 = scmp.eq.s32.totalorder %s22, 0
      %p141 = por %p139, %p140
      %p142 = scmp.le.s32.totalorder 1, %s16
      %p143 = scmp.lt.s32.totalorder %s16, 3
      %p144 = pnand %p142, %p143
      %p145 = pneg %p144
      // Predicated region
      $region9: #{tpu_custom_call.1} parent=5 // pred_check
        _
      $region10: #{tpu_custom_call.1} parent=5 // pred_check_branch
        %147 = sbr.rel (%p144) target = $region12
      $region11: #{tpu_custom_call.1} parent=5 // pred_region
        %s148 = ssub.s32 %s16, 1
        // Predicated region
        $region13: #{tpu_custom_call.1} parent=11 // pred_check
          %p149 = pneg %p80
        $region14: #{tpu_custom_call.1} parent=11 // pred_check_branch
          %151 = sbr.rel (%p149) target = $region16
        $region15: #{tpu_custom_call.1} parent=11 // pred_region
          %s153 = ssub.s32 1280, 1280
          %154 = vsyncadd [#allocation6], %s153
          %s155 = smul.addr %s25, 64
          %s156 = scalar_lea.hbm %s1, %s155
          %s157 = sshll.u32 [#allocation5], 4
          %s158 = int_to_ptr.vmem [resolvable:$true] %s157
          %163 = dma.hbm_to_vmem [thread:$0]  %s156, 1280, %s158, [#allocation6], 64, 64, 4
        $region16: #{tpu_custom_call.1} parent=11 // pred_fallthru
          _
        // Predicated region
        $region17: #{tpu_custom_call.1} parent=11 // pred_check
          %p164 = pneg %p106
        $region18: #{tpu_custom_call.1} parent=11 // pred_check_branch
          %166 = sbr.rel (%p164) target = $region20
        $region19: #{tpu_custom_call.1} parent=11 // pred_region
          %p167 = scmp.lt.s32.totalorder %s25, 0
          %s168 = scalar_select %p167, %s25, 0
          %s169 = scalar_lea.vmem %s2, %s168
        $region20: #{tpu_custom_call.1} parent=11 // pred_fallthru
          _
      $region12: #{tpu_custom_call.1} parent=5 // pred_fallthru
        _
      %p170 = scmp.lt.s32.totalorder %s16, 2
      // Predicated region
      $region21: #{tpu_custom_call.1} parent=5 // pred_check
        %p171 = pneg %p170
      $region22: #{tpu_custom_call.1} parent=5 // pred_check_branch
        %173 = sbr.rel (%p171) target = $region24
      $region23: #{tpu_custom_call.1} parent=5 // pred_region
        // Predicated region
        $region25: #{tpu_custom_call.1} parent=23 // pred_check
          %p174 = pneg %p48
        $region26: #{tpu_custom_call.1} parent=23 // pred_check_branch
          %176 = sbr.rel (%p174) target = $region28
        $region27: #{tpu_custom_call.1} parent=23 // pred_region
          %s177 = sand.u32 %s38, 1
          %s178 = scalar_lea.sflag [#allocation3], %s177
          %s179 = sand.u32 %s38, 1
          %s180 = smul.addr %s179, 272
          %s181 = scalar_lea.vmem [#allocation2], %s180
          %s183 = ssub.s32 4352, 4352
          %184 = vsyncadd %s178, %s183
          %s185 = smul.addr %s24, 68
          %s186 = smul.addr %s185, 64
          %s187 = scalar_lea.hbm %s0, %s186
          %s188 = sshll.u32 %s181, 4
          %s189 = int_to_ptr.vmem [resolvable:$true] %s188
          %194 = dma.hbm_to_vmem [thread:$0]  %s187, 4352, %s189, %s178, 128, 128, 8
        $region28: #{tpu_custom_call.1} parent=23 // pred_fallthru
          _
      $region24: #{tpu_custom_call.1} parent=5 // pred_fallthru
        _
      %p195 = scmp.le.s32.totalorder 1, %s16
      %p196 = scmp.lt.s32.totalorder %s16, 3
      %p197 = pnand %p195, %p196
      %p198 = pneg %p197
      // Predicated region
      $region29: #{tpu_custom_call.1} parent=5 // pred_check
        _
      $region30: #{tpu_custom_call.1} parent=5 // pred_check_branch
        %200 = sbr.rel (%p197) target = $region32
      $region31: #{tpu_custom_call.1} parent=5 // pred_region
        %s201 = ssub.s32 %s16, 1
        %s202 = sand.u32 %s41, 1
        %s203 = scalar_lea.sflag [#allocation3], %s202
        %s204 = sand.u32 %s41, 1
        %s205 = smul.addr %s204, 272
        %s206 = scalar_lea.vmem [#allocation2], %s205
        // Predicated region
        $region33: #{tpu_custom_call.1} parent=31 // pred_check
          %p207 = pneg %p54
        $region34: #{tpu_custom_call.1} parent=31 // pred_check_branch
          %209 = sbr.rel (%p207) target = $region36
        $region35: #{tpu_custom_call.1} parent=31 // pred_region
          %210 = dma.done %s203, 4352
        $region36: #{tpu_custom_call.1} parent=31 // pred_fallthru
          _
        // Predicated region
        $region37: #{tpu_custom_call.1} parent=31 // pred_check
          %p211 = pneg %p80
        $region38: #{tpu_custom_call.1} parent=31 // pred_check_branch
          %213 = sbr.rel (%p211) target = $region40
        $region39: #{tpu_custom_call.1} parent=31 // pred_region
          %214 = dma.done [#allocation6], 1280
        $region40: #{tpu_custom_call.1} parent=31 // pred_fallthru
          _
        %s215 = sand.u32 %s41, 1
        %s216 = scalar_lea.sflag [#allocation3], %s215
        %s217 = sand.u32 %s41, 1
        %s218 = smul.addr %s217, 272
        %s219 = scalar_lea.vmem [#allocation2], %s218
        %p220 = pneg %p54
        %p221 = pneg %p51
        %p222 = pneg %p80
        %p223 = pneg %p77
        %p224 = scmp.lt.s32.totalorder %s25, 0
        %s225 = scalar_select %p224, %s25, 0
        %s226 = scalar_lea.vmem %s2, %s225
        %p227 = pneg %p106
        %p228 = pneg %p103
        %p229 = pneg %p134
        %p230 = pneg %p131
        %s231 = sand.u32 %s121, 1
        %s232 = scalar_lea.sflag [#allocation4], %s231
        %s233 = sand.u32 %s121, 1
        %s234 = smul.addr %s233, 136
        %s235 = scalar_lea.vmem [#allocation7], %s234
        %p236 = scmp.lt.s32.totalorder %s25, 0
        %s237 = scalar_select %p236, %s25, 0
        %s238 = scalar_lea.vmem %s2, %s237
        %s239 = smul.u32 34, %s26
        %v241 = vld [vmem:[%s206] sm:$0xff]
        %v242 = vld [vmem:[%s206 + $0x8] sm:$0xff]
        %v243 = vld [vmem:[%s206 + $0x10] sm:$0xff]
        %v244 = vld [vmem:[%s206 + $0x18] sm:$0xff]
        %v245 = vld [vmem:[%s206 + $0x20] sm:$0xff]
        %v246 = vld [vmem:[%s206 + $0x28] sm:$0xff]
        %v247 = vld [vmem:[%s206 + $0x30] sm:$0xff]
        %v248 = vld [vmem:[%s206 + $0x38] sm:$0xff]
        %v249 = vld [vmem:[%s206 + $0x40] sm:$0xff]
        %v250 = vld [vmem:[%s206 + $0x48] sm:$0xff]
        %v251 = vld [vmem:[%s206 + $0x50] sm:$0xff]
        %v252 = vld [vmem:[%s206 + $0x58] sm:$0xff]
        %v253 = vld [vmem:[%s206 + $0x60] sm:$0xff]
        %v254 = vld [vmem:[%s206 + $0x68] sm:$0xff]
        %v255 = vld [vmem:[%s206 + $0x70] sm:$0xff]
        %v256 = vld [vmem:[%s206 + $0x78] sm:$0xff]
        %v257 = vld [vmem:[%s206 + $0x80] sm:$0xff]
        %v258 = vld [vmem:[%s206 + $0x88] sm:$0xff]
        %v259 = vld [vmem:[%s206 + $0x90] sm:$0xff]
        %v260 = vld [vmem:[%s206 + $0x98] sm:$0xff]
        %v261 = vld [vmem:[%s206 + $0xa0] sm:$0xff]
        %v262 = vld [vmem:[%s206 + $0xa8] sm:$0xff]
        %v263 = vld [vmem:[%s206 + $0xb0] sm:$0xff]
        %v264 = vld [vmem:[%s206 + $0xb8] sm:$0xff]
        %v265 = vld [vmem:[%s206 + $0xc0] sm:$0xff]
        %v266 = vld [vmem:[%s206 + $0xc8] sm:$0xff]
        %v267 = vld [vmem:[%s206 + $0xd0] sm:$0xff]
        %v268 = vld [vmem:[%s206 + $0xd8] sm:$0xff]
        %v269 = vld [vmem:[%s206 + $0xe0] sm:$0xff]
        %v270 = vld [vmem:[%s206 + $0xe8] sm:$0xff]
        %v271 = vld [vmem:[%s206 + $0xf0] sm:$0xff]
        %v272 = vld [vmem:[%s206 + $0xf8] sm:$0xff]
        %v273 = vld [vmem:[%s206 + $0x100] sm:$0xff]
        %v274 = vld [vmem:[%s206 + $0x108] sm:$0xff]
        %v275 = vld [vmem:[#allocation5] sm:$0xf]
        %v276 = vld [vmem:[#allocation5 + $0x4] sm:$0xf]
        %v277 = vld [vmem:[#allocation5 + $0x8] sm:$0xf]
        %v278 = vld [vmem:[#allocation5 + $0xc] sm:$0xf]
        %v279 = vld [vmem:[#allocation5 + $0x10] sm:$0xf]
        %v280 = vld [vmem:[#allocation5 + $0x14] sm:$0xf]
        %v281 = vld [vmem:[#allocation5 + $0x18] sm:$0xf]
        %v282 = vld [vmem:[#allocation5 + $0x1c] sm:$0xf]
        %v283 = vld [vmem:[#allocation5 + $0x20] sm:$0xf]
        %v284 = vld [vmem:[#allocation5 + $0x24] sm:$0xf]
        %v285 = vld [vmem:[#allocation5 + $0x28] sm:$0xf]
        %v286 = vld [vmem:[#allocation5 + $0x2c] sm:$0xf]
        %v287 = vld [vmem:[#allocation5 + $0x30] sm:$0xf]
        %v288 = vld [vmem:[#allocation5 + $0x34] sm:$0xf]
        %v289 = vld [vmem:[#allocation5 + $0x38] sm:$0xf]
        %v290 = vld [vmem:[#allocation5 + $0x3c] sm:$0xf]
        %v291 = vld [vmem:[#allocation5 + $0x40] sm:$0xf]
        %v292 = vld [vmem:[#allocation5 + $0x44] sm:$0xf]
        %v293 = vld [vmem:[#allocation5 + $0x48] sm:$0xf]
        %v294 = vld [vmem:[#allocation5 + $0x4c] sm:$0xf]
        %v295 = vld [vmem:[%s238] sm:$0x1]
        %v297 = vlaneseq
        %v298 = vshrl.u32 %v297, 7
        %v299 = vsub.s32 0, %v298
        %v300 = vrot.slane %v295, %v299
        %v336 = vunpack.c.l.b16 %v241
        %v337 = vunpack.c.h.b16 %v241
        %v338 = vunpack.c.l.b16 %v242
        %v339 = vunpack.c.h.b16 %v242
        %v340 = vunpack.c.l.b16 %v243
        %v341 = vunpack.c.h.b16 %v243
        %v342 = vunpack.c.l.b16 %v244
        %v343 = vunpack.c.h.b16 %v244
        %v344 = vunpack.c.l.b16 %v245
        %v345 = vunpack.c.h.b16 %v245
        %v346 = vunpack.c.l.b16 %v246
        %v347 = vunpack.c.h.b16 %v246
        %v348 = vunpack.c.l.b16 %v247
        %v349 = vunpack.c.h.b16 %v247
        %v350 = vunpack.c.l.b16 %v248
        %v351 = vunpack.c.h.b16 %v248
        %v352 = vunpack.c.l.b16 %v249
        %v353 = vunpack.c.h.b16 %v249
        %v354 = vunpack.c.l.b16 %v250
        %v355 = vunpack.c.h.b16 %v250
        %v356 = vunpack.c.l.b16 %v251
        %v357 = vunpack.c.h.b16 %v251
        %v358 = vunpack.c.l.b16 %v252
        %v359 = vunpack.c.h.b16 %v252
        %v360 = vunpack.c.l.b16 %v253
        %v361 = vunpack.c.h.b16 %v253
        %v362 = vunpack.c.l.b16 %v254
        %v363 = vunpack.c.h.b16 %v254
        %v364 = vunpack.c.l.b16 %v255
        %v365 = vunpack.c.h.b16 %v255
        %v366 = vunpack.c.l.b16 %v256
        %v367 = vunpack.c.h.b16 %v256
        %v368 = vunpack.c.l.b16 %v257
        %v369 = vunpack.c.h.b16 %v257
        %v370 = vunpack.c.l.b16 %v258
        %v371 = vunpack.c.h.b16 %v258
        %v372 = vunpack.c.l.b16 %v259
        %v373 = vunpack.c.h.b16 %v259
        %v374 = vunpack.c.l.b16 %v260
        %v375 = vunpack.c.h.b16 %v260
        %v376 = vunpack.c.l.b16 %v261
        %v377 = vunpack.c.h.b16 %v261
        %v378 = vunpack.c.l.b16 %v262
        %v379 = vunpack.c.h.b16 %v262
        %v380 = vunpack.c.l.b16 %v263
        %v381 = vunpack.c.h.b16 %v263
        %v382 = vunpack.c.l.b16 %v264
        %v383 = vunpack.c.h.b16 %v264
        %v384 = vunpack.c.l.b16 %v265
        %v385 = vunpack.c.h.b16 %v265
        %v386 = vunpack.c.l.b16 %v266
        %v387 = vunpack.c.h.b16 %v266
        %v388 = vunpack.c.l.b16 %v267
        %v389 = vunpack.c.h.b16 %v267
        %v390 = vunpack.c.l.b16 %v268
        %v391 = vunpack.c.h.b16 %v268
        %v392 = vunpack.c.l.b16 %v269
        %v393 = vunpack.c.h.b16 %v269
        %v394 = vunpack.c.l.b16 %v270
        %v395 = vunpack.c.h.b16 %v270
        %v396 = vunpack.c.l.b16 %v271
        %v397 = vunpack.c.h.b16 %v271
        %v398 = vunpack.c.l.b16 %v272
        %v399 = vunpack.c.h.b16 %v272
        %v400 = vunpack.c.l.b16 %v273
        %v401 = vunpack.c.h.b16 %v273
        %v402 = vunpack.c.l.b16 %v274
        %v403 = vunpack.c.h.b16 %v274
        %v404 = vpack.c.b16 %v338, %v336
        %v405 = vpack.c.b16 %v339, %v337
        %v406 = vpack.c.b16 %v342, %v340
        %v407 = vpack.c.b16 %v343, %v341
        %v408 = vpack.c.b16 %v346, %v344
        %v409 = vpack.c.b16 %v347, %v345
        %v410 = vpack.c.b16 %v350, %v348
        %v411 = vpack.c.b16 %v351, %v349
        %v412 = vpack.c.b16 %v354, %v352
        %v413 = vpack.c.b16 %v355, %v353
        %v414 = vpack.c.b16 %v358, %v356
        %v415 = vpack.c.b16 %v359, %v357
        %v416 = vpack.c.b16 %v362, %v360
        %v417 = vpack.c.b16 %v363, %v361
        %v418 = vpack.c.b16 %v366, %v364
        %v419 = vpack.c.b16 %v367, %v365
        %v420 = vpack.c.b16 %v370, %v368
        %v421 = vpack.c.b16 %v371, %v369
        %v422 = vpack.c.b16 %v374, %v372
        %v423 = vpack.c.b16 %v375, %v373
        %v424 = vpack.c.b16 %v378, %v376
        %v425 = vpack.c.b16 %v379, %v377
        %v426 = vpack.c.b16 %v382, %v380
        %v427 = vpack.c.b16 %v383, %v381
        %v428 = vpack.c.b16 %v386, %v384
        %v429 = vpack.c.b16 %v387, %v385
        %v430 = vpack.c.b16 %v390, %v388
        %v431 = vpack.c.b16 %v391, %v389
        %v432 = vpack.c.b16 %v394, %v392
        %v433 = vpack.c.b16 %v395, %v393
        %v434 = vpack.c.b16 %v398, %v396
        %v435 = vpack.c.b16 %v399, %v397
        %v436 = vpack.c.b16 %v402, %v400
        %v437 = vpack.c.b16 %v403, %v401
        %v475 = vunpack.c.l.b16 %v275
        %v476 = vunpack.c.l.b16 %v276
        %v477 = vunpack.c.l.b16 %v277
        %v478 = vunpack.c.l.b16 %v278
        %v479 = vunpack.c.l.b16 %v279
        %v480 = vunpack.c.l.b16 %v280
        %v481 = vunpack.c.l.b16 %v281
        %v482 = vunpack.c.l.b16 %v282
        %v483 = vunpack.c.l.b16 %v283
        %v484 = vunpack.c.l.b16 %v284
        %v485 = vunpack.c.l.b16 %v285
        %v486 = vunpack.c.l.b16 %v286
        %v487 = vunpack.c.l.b16 %v287
        %v488 = vunpack.c.l.b16 %v288
        %v489 = vunpack.c.l.b16 %v289
        %v490 = vunpack.c.l.b16 %v290
        %v491 = vunpack.c.l.b16 %v291
        %v492 = vunpack.c.l.b16 %v292
        %v493 = vunpack.c.l.b16 %v293
        %v494 = vunpack.c.l.b16 %v294
        %v495 = vpack.c.b16 %v476, %v475
        %v496 = vpack.c.b16 %v478, %v477
        %v497 = vpack.c.b16 %v480, %v479
        %v498 = vpack.c.b16 %v482, %v481
        %v499 = vpack.c.b16 %v484, %v483
        %v500 = vpack.c.b16 %v486, %v485
        %v501 = vpack.c.b16 %v488, %v487
        %v502 = vpack.c.b16 %v490, %v489
        %v503 = vpack.c.b16 %v492, %v491
        %v504 = vpack.c.b16 %v494, %v493
        %vm515 = vcmask 261120
        %v517 = vsel %vm515, %v405, 0
        %v520 = vsel %vm515, %v407, 0
        %v523 = vsel %vm515, %v409, 0
        %v526 = vsel %vm515, %v411, 0
        %v529 = vsel %vm515, %v413, 0
        %v532 = vsel %vm515, %v415, 0
        %v535 = vsel %vm515, %v417, 0
        %v538 = vsel %vm515, %v419, 0
        %v541 = vsel %vm515, %v421, 0
        %v544 = vsel %vm515, %v423, 0
        %v547 = vsel %vm515, %v425, 0
        %v550 = vsel %vm515, %v427, 0
        %v553 = vsel %vm515, %v429, 0
        %v556 = vsel %vm515, %v431, 0
        %v559 = vsel %vm515, %v433, 0
        %v562 = vsel %vm515, %v435, 0
        %v565 = vsel %vm515, %v437, 0
        %567 = vmatprep.subr.bf16.mxu0 0
        %568 = vmatpush1.bf16.msra.mxu0 %v502
        %569 = vmatprep.subr.bf16.mxu0 0
        %570 = vmatpush1.bf16.msra.mxu0 %v501
        %571 = vmatprep.subr.bf16.mxu0 0
        %572 = vmatpush1.bf16.msra.mxu0 %v500
        %573 = vmatprep.subr.bf16.mxu0 0
        %574 = vmatpush1.bf16.msra.mxu0 %v499
        %575 = vmatprep.subr.bf16.mxu0 0
        %576 = vmatpush1.bf16.msra.mxu0 %v498
        %577 = vmatprep.subr.bf16.mxu0 0
        %578 = vmatpush1.bf16.msra.mxu0 %v497
        %579 = vmatprep.subr.bf16.mxu0 0
        %580 = vmatpush1.bf16.msra.mxu0 %v496
        %581 = vmatprep.subr.bf16.mxu0 0
        %582 = vmatpush1.bf16.msra.mxu0 %v495
        %583 = vmatprep.subr.bf16.mxu0 0
        %584 = vmatpush2.bf16.msra.mxu0 0
        %585 = vmatprep.subr.bf16.mxu0 0
        %586 = vmatpush2.bf16.msra.mxu0 0
        %587 = vmatprep.subr.bf16.mxu0 0
        %588 = vmatpush2.bf16.msra.mxu0 0
        %589 = vmatprep.subr.bf16.mxu0 0
        %590 = vmatpush2.bf16.msra.mxu0 0
        %591 = vmatprep.subr.bf16.mxu0 0
        %592 = vmatpush2.bf16.msra.mxu0 0
        %593 = vmatprep.subr.bf16.mxu0 0
        %594 = vmatpush2.bf16.msra.mxu0 0
        %595 = vmatprep.subr.bf16.mxu0 0
        %596 = vmatpush2.bf16.msra.mxu0 %v504
        %597 = vmatprep.subr.bf16.mxu0 0
        %598 = vmatpush2.bf16.msra.mxu0 %v503
        %599 = vmatprep.mubr.bf16.mxu0 %v517
        %600 = vmatmul.mubr.bf16.gmra.mxu0 %v404
        %v601 = vpop.f32.mrf.mxu0
        %v602 = vadd.f32 %v300, %v601
        %v603 = vpop.f32.mrf.mxu0
        %v604 = vpop.f32.mrf.mxu0
        %v605 = vadd.f32 %v300, %v604
        %v606 = vpop.f32.mrf.mxu0
        %607 = vmatprep.mubr.bf16.mxu0 %v520
        %608 = vmatmul.mubr.bf16.gmra.mxu0 %v406
        %v609 = vpop.f32.mrf.mxu0
        %v610 = vadd.f32 %v300, %v609
        %v611 = vpop.f32.mrf.mxu0
        %v612 = vpop.f32.mrf.mxu0
        %v613 = vadd.f32 %v300, %v612
        %v614 = vpop.f32.mrf.mxu0
        %615 = vmatprep.mubr.bf16.mxu0 %v523
        %616 = vmatmul.mubr.bf16.gmra.mxu0 %v408
        %v617 = vpop.f32.mrf.mxu0
        %v618 = vadd.f32 %v300, %v617
        %v619 = vpop.f32.mrf.mxu0
        %v620 = vpop.f32.mrf.mxu0
        %v621 = vadd.f32 %v300, %v620
        %v622 = vpop.f32.mrf.mxu0
        %623 = vmatprep.mubr.bf16.mxu0 %v526
        %624 = vmatmul.mubr.bf16.gmra.mxu0 %v410
        %v625 = vpop.f32.mrf.mxu0
        %v626 = vadd.f32 %v300, %v625
        %v627 = vpop.f32.mrf.mxu0
        %v628 = vpop.f32.mrf.mxu0
        %v629 = vadd.f32 %v300, %v628
        %v630 = vpop.f32.mrf.mxu0
        %631 = vmatprep.mubr.bf16.mxu0 %v529
        %632 = vmatmul.mubr.bf16.gmra.mxu0 %v412
        %v633 = vpop.f32.mrf.mxu0
        %v634 = vadd.f32 %v300, %v633
        %v635 = vpop.f32.mrf.mxu0
        %v636 = vpop.f32.mrf.mxu0
        %v637 = vadd.f32 %v300, %v636
        %v638 = vpop.f32.mrf.mxu0
        %639 = vmatprep.mubr.bf16.mxu0 %v532
        %640 = vmatmul.mubr.bf16.gmra.mxu0 %v414
        %v641 = vpop.f32.mrf.mxu0
        %v642 = vadd.f32 %v300, %v641
        %v643 = vpop.f32.mrf.mxu0
        %v644 = vpop.f32.mrf.mxu0
        %v645 = vadd.f32 %v300, %v644
        %v646 = vpop.f32.mrf.mxu0
        %647 = vmatprep.mubr.bf16.mxu0 %v535
        %648 = vmatmul.mubr.bf16.gmra.mxu0 %v416
        %v649 = vpop.f32.mrf.mxu0
        %v650 = vadd.f32 %v300, %v649
        %v651 = vpop.f32.mrf.mxu0
        %v652 = vpop.f32.mrf.mxu0
        %v653 = vadd.f32 %v300, %v652
        %v654 = vpop.f32.mrf.mxu0
        %655 = vmatprep.mubr.bf16.mxu0 %v538
        %656 = vmatmul.mubr.bf16.gmra.mxu0 %v418
        %v657 = vpop.f32.mrf.mxu0
        %v658 = vadd.f32 %v300, %v657
        %v659 = vpop.f32.mrf.mxu0
        %v660 = vpop.f32.mrf.mxu0
        %v661 = vadd.f32 %v300, %v660
        %v662 = vpop.f32.mrf.mxu0
        %663 = vmatprep.mubr.bf16.mxu0 %v541
        %664 = vmatmul.mubr.bf16.gmra.mxu0 %v420
        %v665 = vpop.f32.mrf.mxu0
        %v666 = vadd.f32 %v300, %v665
        %v667 = vpop.f32.mrf.mxu0
        %v668 = vpop.f32.mrf.mxu0
        %v669 = vadd.f32 %v300, %v668
        %v670 = vpop.f32.mrf.mxu0
        %671 = vmatprep.mubr.bf16.mxu0 %v544
        %672 = vmatmul.mubr.bf16.gmra.mxu0 %v422
        %v673 = vpop.f32.mrf.mxu0
        %v674 = vadd.f32 %v300, %v673
        %v675 = vpop.f32.mrf.mxu0
        %v676 = vpop.f32.mrf.mxu0
        %v677 = vadd.f32 %v300, %v676
        %v678 = vpop.f32.mrf.mxu0
        %679 = vmatprep.mubr.bf16.mxu0 %v547
        %680 = vmatmul.mubr.bf16.gmra.mxu0 %v424
        %v681 = vpop.f32.mrf.mxu0
        %v682 = vadd.f32 %v300, %v681
        %v683 = vpop.f32.mrf.mxu0
        %v684 = vpop.f32.mrf.mxu0
        %v685 = vadd.f32 %v300, %v684
        %v686 = vpop.f32.mrf.mxu0
        %687 = vmatprep.mubr.bf16.mxu0 %v550
        %688 = vmatmul.mubr.bf16.gmra.mxu0 %v426
        %v689 = vpop.f32.mrf.mxu0
        %v690 = vadd.f32 %v300, %v689
        %v691 = vpop.f32.mrf.mxu0
        %v692 = vpop.f32.mrf.mxu0
        %v693 = vadd.f32 %v300, %v692
        %v694 = vpop.f32.mrf.mxu0
        %695 = vmatprep.mubr.bf16.mxu0 %v553
        %696 = vmatmul.mubr.bf16.gmra.mxu0 %v428
        %v697 = vpop.f32.mrf.mxu0
        %v698 = vadd.f32 %v300, %v697
        %v699 = vpop.f32.mrf.mxu0
        %v700 = vpop.f32.mrf.mxu0
        %v701 = vadd.f32 %v300, %v700
        %v702 = vpop.f32.mrf.mxu0
        %703 = vmatprep.mubr.bf16.mxu0 %v556
        %704 = vmatmul.mubr.bf16.gmra.mxu0 %v430
        %v705 = vpop.f32.mrf.mxu0
        %v706 = vadd.f32 %v300, %v705
        %v707 = vpop.f32.mrf.mxu0
        %v708 = vpop.f32.mrf.mxu0
        %v709 = vadd.f32 %v300, %v708
        %v710 = vpop.f32.mrf.mxu0
        %711 = vmatprep.mubr.bf16.mxu0 %v559
        %712 = vmatmul.mubr.bf16.gmra.mxu0 %v432
        %v713 = vpop.f32.mrf.mxu0
        %v714 = vadd.f32 %v300, %v713
        %v715 = vpop.f32.mrf.mxu0
        %v716 = vpop.f32.mrf.mxu0
        %v717 = vadd.f32 %v300, %v716
        %v718 = vpop.f32.mrf.mxu0
        %719 = vmatprep.mubr.bf16.mxu0 %v562
        %720 = vmatmul.mubr.bf16.gmra.mxu0 %v434
        %v721 = vpop.f32.mrf.mxu0
        %v722 = vadd.f32 %v300, %v721
        %v723 = vpop.f32.mrf.mxu0
        %v724 = vpop.f32.mrf.mxu0
        %v725 = vadd.f32 %v300, %v724
        %v726 = vpop.f32.mrf.mxu0
        %727 = vmatprep.mubr.bf16.mxu0 %v565
        %728 = vmatmul.mubr.bf16.gmra.mxu0 %v436
        %v729 = vpop.f32.mrf.mxu0
        %v730 = vadd.f32 %v300, %v729
        %v731 = vpop.f32.mrf.mxu0
        %v732 = vpop.f32.mrf.mxu0
        %v733 = vadd.f32 %v300, %v732
        %v734 = vpop.f32.mrf.mxu0
        %735 = vdwg.mxu0
        %vm736 = vcmp.gt.f32.partialorder %v602, 0.0
        %vm737 = vcmp.gt.f32.partialorder %v605, 0.0
        %vm738 = vcmp.gt.f32.partialorder %v610, 0.0
        %vm739 = vcmp.gt.f32.partialorder %v613, 0.0
        %vm740 = vcmp.gt.f32.partialorder %v618, 0.0
        %vm741 = vcmp.gt.f32.partialorder %v621, 0.0
        %vm742 = vcmp.gt.f32.partialorder %v626, 0.0
        %vm743 = vcmp.gt.f32.partialorder %v629, 0.0
        %vm744 = vcmp.gt.f32.partialorder %v634, 0.0
        %vm745 = vcmp.gt.f32.partialorder %v637, 0.0
        %vm746 = vcmp.gt.f32.partialorder %v642, 0.0
        %vm747 = vcmp.gt.f32.partialorder %v645, 0.0
        %vm748 = vcmp.gt.f32.partialorder %v650, 0.0
        %vm749 = vcmp.gt.f32.partialorder %v653, 0.0
        %vm750 = vcmp.gt.f32.partialorder %v658, 0.0
        %vm751 = vcmp.gt.f32.partialorder %v661, 0.0
        %vm752 = vcmp.gt.f32.partialorder %v666, 0.0
        %vm753 = vcmp.gt.f32.partialorder %v669, 0.0
        %vm754 = vcmp.gt.f32.partialorder %v674, 0.0
        %vm755 = vcmp.gt.f32.partialorder %v677, 0.0
        %vm756 = vcmp.gt.f32.partialorder %v682, 0.0
        %vm757 = vcmp.gt.f32.partialorder %v685, 0.0
        %vm758 = vcmp.gt.f32.partialorder %v690, 0.0
        %vm759 = vcmp.gt.f32.partialorder %v693, 0.0
        %vm760 = vcmp.gt.f32.partialorder %v698, 0.0
        %vm761 = vcmp.gt.f32.partialorder %v701, 0.0
        %vm762 = vcmp.gt.f32.partialorder %v706, 0.0
        %vm763 = vcmp.gt.f32.partialorder %v709, 0.0
        %vm764 = vcmp.gt.f32.partialorder %v714, 0.0
        %vm765 = vcmp.gt.f32.partialorder %v717, 0.0
        %vm766 = vcmp.gt.f32.partialorder %v722, 0.0
        %vm767 = vcmp.gt.f32.partialorder %v725, 0.0
        %vm768 = vcmp.gt.f32.partialorder %v730, 0.0
        %vm769 = vcmp.gt.f32.partialorder %v733, 0.0
        %v770 = vmul.f32 %v602, 0.2
        %v771 = vmul.f32 %v605, 0.2
        %v772 = vmul.f32 %v610, 0.2
        %v773 = vmul.f32 %v613, 0.2
        %v774 = vmul.f32 %v618, 0.2
        %v775 = vmul.f32 %v621, 0.2
        %v776 = vmul.f32 %v626, 0.2
        %v777 = vmul.f32 %v629, 0.2
        %v778 = vmul.f32 %v634, 0.2
        %v779 = vmul.f32 %v637, 0.2
        %v780 = vmul.f32 %v642, 0.2
        %v781 = vmul.f32 %v645, 0.2
        %v782 = vmul.f32 %v650, 0.2
        %v783 = vmul.f32 %v653, 0.2
        %v784 = vmul.f32 %v658, 0.2
        %v785 = vmul.f32 %v661, 0.2
        %v786 = vmul.f32 %v666, 0.2
        %v787 = vmul.f32 %v669, 0.2
        %v788 = vmul.f32 %v674, 0.2
        %v789 = vmul.f32 %v677, 0.2
        %v790 = vmul.f32 %v682, 0.2
        %v791 = vmul.f32 %v685, 0.2
        %v792 = vmul.f32 %v690, 0.2
        %v793 = vmul.f32 %v693, 0.2
        %v794 = vmul.f32 %v698, 0.2
        %v795 = vmul.f32 %v701, 0.2
        %v796 = vmul.f32 %v706, 0.2
        %v797 = vmul.f32 %v709, 0.2
        %v798 = vmul.f32 %v714, 0.2
        %v799 = vmul.f32 %v717, 0.2
        %v800 = vmul.f32 %v722, 0.2
        %v801 = vmul.f32 %v725, 0.2
        %v802 = vmul.f32 %v730, 0.2
        %v803 = vmul.f32 %v733, 0.2
        %v804 = vsel %vm736, %v602, %v770
        %v805 = vsel %vm737, %v605, %v771
        %v806 = vsel %vm738, %v610, %v772
        %v807 = vsel %vm739, %v613, %v773
        %v808 = vsel %vm740, %v618, %v774
        %v809 = vsel %vm741, %v621, %v775
        %v810 = vsel %vm742, %v626, %v776
        %v811 = vsel %vm743, %v629, %v777
        %v812 = vsel %vm744, %v634, %v778
        %v813 = vsel %vm745, %v637, %v779
        %v814 = vsel %vm746, %v642, %v780
        %v815 = vsel %vm747, %v645, %v781
        %v816 = vsel %vm748, %v650, %v782
        %v817 = vsel %vm749, %v653, %v783
        %v818 = vsel %vm750, %v658, %v784
        %v819 = vsel %vm751, %v661, %v785
        %v820 = vsel %vm752, %v666, %v786
        %v821 = vsel %vm753, %v669, %v787
        %v822 = vsel %vm754, %v674, %v788
        %v823 = vsel %vm755, %v677, %v789
        %v824 = vsel %vm756, %v682, %v790
        %v825 = vsel %vm757, %v685, %v791
        %v826 = vsel %vm758, %v690, %v792
        %v827 = vsel %vm759, %v693, %v793
        %v828 = vsel %vm760, %v698, %v794
        %v829 = vsel %vm761, %v701, %v795
        %v830 = vsel %vm762, %v706, %v796
        %v831 = vsel %vm763, %v709, %v797
        %v832 = vsel %vm764, %v714, %v798
        %v833 = vsel %vm765, %v717, %v799
        %v834 = vsel %vm766, %v722, %v800
        %v835 = vsel %vm767, %v725, %v801
        %v836 = vsel %vm768, %v730, %v802
        %v837 = vsel %vm769, %v733, %v803
        %v838 = vpack.c.bf16 %v805, %v804
        %v839 = vpack.c.bf16 %v807, %v806
        %v840 = vpack.c.bf16 %v809, %v808
        %v841 = vpack.c.bf16 %v811, %v810
        %v842 = vpack.c.bf16 %v813, %v812
        %v843 = vpack.c.bf16 %v815, %v814
        %v844 = vpack.c.bf16 %v817, %v816
        %v845 = vpack.c.bf16 %v819, %v818
        %v846 = vpack.c.bf16 %v821, %v820
        %v847 = vpack.c.bf16 %v823, %v822
        %v848 = vpack.c.bf16 %v825, %v824
        %v849 = vpack.c.bf16 %v827, %v826
        %v850 = vpack.c.bf16 %v829, %v828
        %v851 = vpack.c.bf16 %v831, %v830
        %v852 = vpack.c.bf16 %v833, %v832
        %v853 = vpack.c.bf16 %v835, %v834
        %v854 = vpack.c.bf16 %v837, %v836
        %v872 = vunpack.c.l.b16 %v838
        %v873 = vunpack.c.h.b16 %v838
        %v874 = vunpack.c.l.b16 %v839
        %v875 = vunpack.c.h.b16 %v839
        %v876 = vunpack.c.l.b16 %v840
        %v877 = vunpack.c.h.b16 %v840
        %v878 = vunpack.c.l.b16 %v841
        %v879 = vunpack.c.h.b16 %v841
        %v880 = vunpack.c.l.b16 %v842
        %v881 = vunpack.c.h.b16 %v842
        %v882 = vunpack.c.l.b16 %v843
        %v883 = vunpack.c.h.b16 %v843
        %v884 = vunpack.c.l.b16 %v844
        %v885 = vunpack.c.h.b16 %v844
        %v886 = vunpack.c.l.b16 %v845
        %v887 = vunpack.c.h.b16 %v845
        %v888 = vunpack.c.l.b16 %v846
        %v889 = vunpack.c.h.b16 %v846
        %v890 = vunpack.c.l.b16 %v847
        %v891 = vunpack.c.h.b16 %v847
        %v892 = vunpack.c.l.b16 %v848
        %v893 = vunpack.c.h.b16 %v848
        %v894 = vunpack.c.l.b16 %v849
        %v895 = vunpack.c.h.b16 %v849
        %v896 = vunpack.c.l.b16 %v850
        %v897 = vunpack.c.h.b16 %v850
        %v898 = vunpack.c.l.b16 %v851
        %v899 = vunpack.c.h.b16 %v851
        %v900 = vunpack.c.l.b16 %v852
        %v901 = vunpack.c.h.b16 %v852
        %v902 = vunpack.c.l.b16 %v853
        %v903 = vunpack.c.h.b16 %v853
        %v904 = vunpack.c.l.b16 %v854
        %v905 = vunpack.c.h.b16 %v854
        %v906 = vpack.c.b16 %v872, %v872
        %v907 = vpack.c.b16 %v873, %v873
        %v908 = vpack.c.b16 %v874, %v874
        %v909 = vpack.c.b16 %v875, %v875
        %v910 = vpack.c.b16 %v876, %v876
        %v911 = vpack.c.b16 %v877, %v877
        %v912 = vpack.c.b16 %v878, %v878
        %v913 = vpack.c.b16 %v879, %v879
        %v914 = vpack.c.b16 %v880, %v880
        %v915 = vpack.c.b16 %v881, %v881
        %v916 = vpack.c.b16 %v882, %v882
        %v917 = vpack.c.b16 %v883, %v883
        %v918 = vpack.c.b16 %v884, %v884
        %v919 = vpack.c.b16 %v885, %v885
        %v920 = vpack.c.b16 %v886, %v886
        %v921 = vpack.c.b16 %v887, %v887
        %v922 = vpack.c.b16 %v888, %v888
        %v923 = vpack.c.b16 %v889, %v889
        %v924 = vpack.c.b16 %v890, %v890
        %v925 = vpack.c.b16 %v891, %v891
        %v926 = vpack.c.b16 %v892, %v892
        %v927 = vpack.c.b16 %v893, %v893
        %v928 = vpack.c.b16 %v894, %v894
        %v929 = vpack.c.b16 %v895, %v895
        %v930 = vpack.c.b16 %v896, %v896
        %v931 = vpack.c.b16 %v897, %v897
        %v932 = vpack.c.b16 %v898, %v898
        %v933 = vpack.c.b16 %v899, %v899
        %v934 = vpack.c.b16 %v900, %v900
        %v935 = vpack.c.b16 %v901, %v901
        %v936 = vpack.c.b16 %v902, %v902
        %v937 = vpack.c.b16 %v903, %v903
        %v938 = vpack.c.b16 %v904, %v904
        %v939 = vpack.c.b16 %v905, %v905
        %974 = vst [vmem:[%s235] sm:$0xf] %v906
        %975 = vst [vmem:[%s235 + $0x4] sm:$0xf] %v907
        %976 = vst [vmem:[%s235 + $0x8] sm:$0xf] %v908
        %977 = vst [vmem:[%s235 + $0xc] sm:$0xf] %v909
        %978 = vst [vmem:[%s235 + $0x10] sm:$0xf] %v910
        %979 = vst [vmem:[%s235 + $0x14] sm:$0xf] %v911
        %980 = vst [vmem:[%s235 + $0x18] sm:$0xf] %v912
        %981 = vst [vmem:[%s235 + $0x1c] sm:$0xf] %v913
        %982 = vst [vmem:[%s235 + $0x20] sm:$0xf] %v914
        %983 = vst [vmem:[%s235 + $0x24] sm:$0xf] %v915
        %984 = vst [vmem:[%s235 + $0x28] sm:$0xf] %v916
        %985 = vst [vmem:[%s235 + $0x2c] sm:$0xf] %v917
        %986 = vst [vmem:[%s235 + $0x30] sm:$0xf] %v918
        %987 = vst [vmem:[%s235 + $0x34] sm:$0xf] %v919
        %988 = vst [vmem:[%s235 + $0x38] sm:$0xf] %v920
        %989 = vst [vmem:[%s235 + $0x3c] sm:$0xf] %v921
        %990 = vst [vmem:[%s235 + $0x40] sm:$0xf] %v922
        %991 = vst [vmem:[%s235 + $0x44] sm:$0xf] %v923
        %992 = vst [vmem:[%s235 + $0x48] sm:$0xf] %v924
        %993 = vst [vmem:[%s235 + $0x4c] sm:$0xf] %v925
        %994 = vst [vmem:[%s235 + $0x50] sm:$0xf] %v926
        %995 = vst [vmem:[%s235 + $0x54] sm:$0xf] %v927
        %996 = vst [vmem:[%s235 + $0x58] sm:$0xf] %v928
        %997 = vst [vmem:[%s235 + $0x5c] sm:$0xf] %v929
        %998 = vst [vmem:[%s235 + $0x60] sm:$0xf] %v930
        %999 = vst [vmem:[%s235 + $0x64] sm:$0xf] %v931
        %1000 = vst [vmem:[%s235 + $0x68] sm:$0xf] %v932
        %1001 = vst [vmem:[%s235 + $0x6c] sm:$0xf] %v933
        %1002 = vst [vmem:[%s235 + $0x70] sm:$0xf] %v934
        %1003 = vst [vmem:[%s235 + $0x74] sm:$0xf] %v935
        %1004 = vst [vmem:[%s235 + $0x78] sm:$0xf] %v936
        %1005 = vst [vmem:[%s235 + $0x7c] sm:$0xf] %v937
        %1006 = vst [vmem:[%s235 + $0x80] sm:$0xf] %v938
        %1007 = vst [vmem:[%s235 + $0x84] sm:$0xf] %v939
        %s1008 = sand.u32 %s121, 1
        %s1009 = scalar_lea.sflag [#allocation4], %s1008
        %s1010 = sand.u32 %s121, 1
        %s1011 = smul.addr %s1010, 136
        %s1012 = scalar_lea.vmem [#allocation7], %s1011
        // Predicated region
        $region41: #{tpu_custom_call.1} parent=31 // pred_check
          %p1013 = pneg %p131
        $region42: #{tpu_custom_call.1} parent=31 // pred_check_branch
          %1015 = sbr.rel (%p1013) target = $region44
        $region43: #{tpu_custom_call.1} parent=31 // pred_region
          %s1016 = smul.u32 34, %s26
          %s1018 = ssub.s32 2176, 2176
          %1019 = vsyncadd %s1009, %s1018
          %s1020 = sadd.s32 %s25, %s1016
          %s1021 = smul.addr %s1020, 64
          %s1022 = scalar_lea.hbm %s3, %s1021
          %s1023 = sshll.u32 %s1012, 4
          %s1024 = int_to_ptr.vmem [resolvable:$true] %s1023
          %1029 = dma.vmem_to_hbm [thread:$0]  %s1024, 2176, %s1022, %s1009, 64, 64, 4
        $region44: #{tpu_custom_call.1} parent=31 // pred_fallthru
          _
      $region32: #{tpu_custom_call.1} parent=5 // pred_fallthru
        _
      %p1030 = scmp.le.s32.totalorder 2, %s16
      // Predicated region
      $region45: #{tpu_custom_call.1} parent=5 // pred_check
        %p1031 = pneg %p1030
      $region46: #{tpu_custom_call.1} parent=5 // pred_check_branch
        %1033 = sbr.rel (%p1031) target = $region48
      $region47: #{tpu_custom_call.1} parent=5 // pred_region
        %s1034 = ssub.s32 %s16, 2
        // Predicated region
        $region49: #{tpu_custom_call.1} parent=47 // pred_check
          %p1035 = pneg %p137
        $region50: #{tpu_custom_call.1} parent=47 // pred_check_branch
          %1037 = sbr.rel (%p1035) target = $region52
        $region51: #{tpu_custom_call.1} parent=47 // pred_region
          %s1038 = sand.u32 %s122, 1
          %s1039 = scalar_lea.sflag [#allocation4], %s1038
          %s1040 = sand.u32 %s122, 1
          %s1041 = smul.addr %s1040, 136
          %s1042 = scalar_lea.vmem [#allocation7], %s1041
          %1043 = dma.done %s1039, 2176
        $region52: #{tpu_custom_call.1} parent=47 // pred_fallthru
          _
      $region48: #{tpu_custom_call.1} parent=5 // pred_fallthru
        _
    $region6: #{tpu_custom_call.1} parent=1 // loop_footer
      %s20 = sadd.s32 1, %s16
    $region7: #{tpu_custom_call.1} parent=1 // loop_footer_branch
      %15 = sbr.rel target = $region3
    $region8: #{tpu_custom_call.1} parent=1 // loop_exit
      _
    %1044 = vsyncpa [#allocation3], 1
    %s1045 = scalar_lea.sflag [#allocation3], 1
    %1046 = vsyncpa %s1045, 1
    %1047 = vsyncpa [#allocation6], 1
    %1048 = vsyncpa [#allocation4], 1
    %s1049 = scalar_lea.sflag [#allocation4], 1
    %1050 = vsyncpa %s1049, 1

// kernel: tpu_custom_call.1
$region0: #{tpu_custom_call.1}
  #allocation0 [shape = 'u32[]', space=smem, size = 0x4, offset = 0x4, fixed_abs, tag = 'smem constant byte address 0x4 - core index']
  #allocation1 [shape = 'u32[144,128]{1,0:T(1,128)}', space=vmem, size = 0x12000, scoped, tag = 'internal scratch']
  %s0 = inlined_call_operand.hbm [shape: bf16[2,34,8,160], index: 0, kind: input, shape index: {}]
  %s1 = inlined_call_operand.hbm [shape: bf16[1,160,128], index: 1, kind: input, shape index: {}]
  %s2 = inlined_call_operand.vmem [shape: f32[1,128], index: 2, kind: input, shape index: {}]
  %s3 = inlined_call_operand.hbm [shape: bf16[68,8,128], index: 3, kind: output, shape index: {}]
  %s4 = sld [smem:[#allocation0]]
  $region53: #{tpu_custom_call.1} parent=0
    _
  %s6 = ssub.s32 1, %s4
  %s7 = scalar_select 0, %s6, %s4
  $region1: #{tpu_custom_call.1} parent=0
    #allocation2 [shape = 'u8[278528]{0}', space=vmem, size = 0x44000, scoped, tag = 'input window, operand 0']
    #allocation3 [shape = 's32[2]{0}', space=sflag, size = 0x8, scoped, tag = 'scoped memory for tpu_custom_call.1']
    #allocation4 [shape = 's32[2]{0}', space=sflag, size = 0x8, scoped, tag = 'scoped memory for tpu_custom_call.1']
    #allocation5 [shape = 'u8[40960]{0}', space=vmem, size = 0xa000, scoped, tag = 'input window, operand 1, single buffered']
    #allocation6 [shape = 's32[1]{0}', space=sflag, size = 0x4, scoped, tag = 'scoped memory for tpu_custom_call.1']
    #allocation7 [shape = 'u8[139264]{0}', space=vmem, size = 0x22000, scoped, tag = 'output window, operand 0']
    %8 = vsyncpa [#allocation3], 0
    %s9 = scalar_lea.sflag [#allocation3], 1
    %10 = vsyncpa %s9, 0
    %11 = vsyncpa [#allocation6], 0
    %12 = vsyncpa [#allocation4], 0
    %s13 = scalar_lea.sflag [#allocation4], 1
    %14 = vsyncpa %s13, 0
    loop: start=0, step=1, limit=4
    $region2: #{tpu_custom_call.1} parent=1 // loop_pre_header
      _
    $region3: #{tpu_custom_call.1} parent=1 // loop_header
      %s16 = sphi 0, %s20
      %p17 = scmp.ge.s32.totalorder %s16, 4
      %s23 = sphi 0, %s35
      %s24 = sphi 0, %s31
      %s25 = sphi 0, %s23
      %s26 = sphi 0, %s24
      %s27 = sphi 0, %s25
      %s28 = sphi 0, %s26
      %s38 = sphi 0, %s40
      %s41 = sphi 0, %s38
      %s42 = sphi 0, %s41
      %s58 = sphi 0, %s42
      %s64 = sphi 0, %s66
      %s67 = sphi 0, %s64
      %s68 = sphi 0, %s67
      %s84 = sphi 0, %s68
      %s90 = sphi 0, %s92
      %s93 = sphi 0, %s90
      %s94 = sphi 0, %s93
      %s110 = sphi 0, %s94
      %s118 = sphi 0, %s120
      %s121 = sphi 0, %s118
      %s122 = sphi 0, %s121
      %s138 = sphi 0, %s122
    $region4: #{tpu_custom_call.1} parent=1 // loop_header_branch
      %19 = sbr.rel (%p17) target = $region8
    $region5: #{tpu_custom_call.1} parent=1 // loop_body
      %s21 = ssub.s32 %s16, 1
      %s22 = ssub.s32 %s16, 2
      %s29 = sadd.s32 1, %s24
      %p30 = scmp.ge.s32.totalorder %s29, 2
      %s31 = scalar_select %p30, 0, %s29
      %s32 = sadd.s32 1, %s23
      %s33 = scalar_select %p30, %s32, %s23
      %p34 = scmp.ge.s32.totalorder %s33, 1
      %s35 = scalar_select %p34, 0, %s33
      %s36 = ssub.s32 %s24, %s31
      %p37 = scmp.eq.s32.totalorder %s36, 0
      %s39 = sadd.s32 %s38, 1
      %s40 = scalar_select %p37, %s38, %s39
      %p43 = pneg %p37
      %p44 = scmp.eq.s32.totalorder %s16, 1
      %p45 = por %p43, %p44
      %p46 = scmp.ne.s32.totalorder %s38, %s41
      %p47 = scmp.eq.s32.totalorder %s16, 0
      %p48 = por %p46, %p47
      %p49 = scmp.ne.s32.totalorder %s38, %s41
      %p50 = scmp.eq.s32.totalorder %s21, 1
      %p51 = por %p49, %p50
      %p52 = scmp.ne.s32.totalorder %s41, %s42
      %p53 = scmp.eq.s32.totalorder %s21, 0
      %p54 = por %p52, %p53
      %p55 = scmp.ne.s32.totalorder %s41, %s42
      %p56 = scmp.eq.s32.totalorder %s22, 1
      %p57 = por %p55, %p56
      %p59 = scmp.ne.s32.totalorder %s42, %s58
      %p60 = scmp.eq.s32.totalorder %s22, 0
      %p61 = por %p59, %p60
      %s62 = ssub.s32 %s23, %s35
      %p63 = scmp.eq.s32.totalorder %s62, 0
      %s65 = sadd.s32 %s64, 1
      %s66 = scalar_select %p63, %s64, %s65
      %p69 = pneg %p63
      %p70 = scmp.eq.s32.totalorder %s16, 1
      %p71 = por %p69, %p70
      %p72 = scmp.ne.s32.totalorder %s64, %s67
      %p73 = scmp.eq.s32.totalorder %s16, 0
      %p74 = por %p72, %p73
      %p75 = scmp.ne.s32.totalorder %s64, %s67
      %p76 = scmp.eq.s32.totalorder %s21, 1
      %p77 = por %p75, %p76
      %p78 = scmp.ne.s32.totalorder %s67, %s68
      %p79 = scmp.eq.s32.totalorder %s21, 0
      %p80 = por %p78, %p79
      %p81 = scmp.ne.s32.totalorder %s67, %s68
      %p82 = scmp.eq.s32.totalorder %s22, 1
      %p83 = por %p81, %p82
      %p85 = scmp.ne.s32.totalorder %s68, %s84
      %p86 = scmp.eq.s32.totalorder %s22, 0
      %p87 = por %p85, %p86
      %s88 = ssub.s32 %s23, %s35
      %p89 = scmp.eq.s32.totalorder %s88, 0
      %s91 = sadd.s32 %s90, 1
      %s92 = scalar_select %p89, %s90, %s91
      %p95 = pneg %p89
      %p96 = scmp.eq.s32.totalorder %s16, 1
      %p97 = por %p95, %p96
      %p98 = scmp.ne.s32.totalorder %s90, %s93
      %p99 = scmp.eq.s32.totalorder %s16, 0
      %p100 = por %p98, %p99
      %p101 = scmp.ne.s32.totalorder %s90, %s93
      %p102 = scmp.eq.s32.totalorder %s21, 1
      %p103 = por %p101, %p102
      %p104 = scmp.ne.s32.totalorder %s93, %s94
      %p105 = scmp.eq.s32.totalorder %s21, 0
      %p106 = por %p104, %p105
      %p107 = scmp.ne.s32.totalorder %s93, %s94
      %p108 = scmp.eq.s32.totalorder %s22, 1
      %p109 = por %p107, %p108
      %p111 = scmp.ne.s32.totalorder %s94, %s110
      %p112 = scmp.eq.s32.totalorder %s22, 0
      %p113 = por %p111, %p112
      %s114 = ssub.s32 %s24, %s31
      %s115 = ssub.s32 %s23, %s35
      %s116 = sor.u32 %s114, %s115
      %p117 = scmp.eq.s32.totalorder %s116, 0
      %s119 = sadd.s32 %s118, 1
      %s120 = scalar_select %p117, %s118, %s119
      %p123 = pneg %p117
      %p124 = scmp.eq.s32.totalorder %s16, 1
      %p125 = por %p123, %p124
      %p126 = scmp.ne.s32.totalorder %s118, %s121
      %p127 = scmp.eq.s32.totalorder %s16, 0
      %p128 = por %p126, %p127
      %p129 = scmp.ne.s32.totalorder %s118, %s121
      %p130 = scmp.eq.s32.totalorder %s21, 1
      %p131 = por %p129, %p130
      %p132 = scmp.ne.s32.totalorder %s121, %s122
      %p133 = scmp.eq.s32.totalorder %s21, 0
      %p134 = por %p132, %p133
      %p135 = scmp.ne.s32.totalorder %s121, %s122
      %p136 = scmp.eq.s32.totalorder %s22, 1
      %p137 = por %p135, %p136
      %p139 = scmp.ne.s32.totalorder %s122, %s138
      %p140 = scmp.eq.s32.totalorder %s22, 0
      %p141 = por %p139, %p140
      %p142 = scmp.le.s32.totalorder 1, %s16
      %p143 = scmp.lt.s32.totalorder %s16, 3
      %p144 = pnand %p142, %p143
      %p145 = pneg %p144
      // Predicated region
      $region9: #{tpu_custom_call.1} parent=5 // pred_check
        _
      $region10: #{tpu_custom_call.1} parent=5 // pred_check_branch
        %147 = sbr.rel (%p144) target = $region12
      $region11: #{tpu_custom_call.1} parent=5 // pred_region
        %s148 = ssub.s32 %s16, 1
        // Predicated region
        $region13: #{tpu_custom_call.1} parent=11 // pred_check
          %p149 = pneg %p80
        $region14: #{tpu_custom_call.1} parent=11 // pred_check_branch
          %151 = sbr.rel (%p149) target = $region16
        $region15: #{tpu_custom_call.1} parent=11 // pred_region
          %s153 = ssub.s32 1280, 1280
          %154 = vsyncadd [#allocation6], %s153
          %s155 = smul.addr %s25, 64
          %s156 = scalar_lea.hbm %s1, %s155
          %s157 = sshll.u32 [#allocation5], 4
          %s158 = int_to_ptr.vmem [resolvable:$true] %s157
          %163 = dma.hbm_to_vmem [thread:$0]  %s156, 1280, %s158, [#allocation6], 64, 64, 4
        $region16: #{tpu_custom_call.1} parent=11 // pred_fallthru
          _
        // Predicated region
        $region17: #{tpu_custom_call.1} parent=11 // pred_check
          %p164 = pneg %p106
        $region18: #{tpu_custom_call.1} parent=11 // pred_check_branch
          %166 = sbr.rel (%p164) target = $region20
        $region19: #{tpu_custom_call.1} parent=11 // pred_region
          %p167 = scmp.lt.s32.totalorder %s25, 0
          %s168 = scalar_select %p167, %s25, 0
          %s169 = scalar_lea.vmem %s2, %s168
        $region20: #{tpu_custom_call.1} parent=11 // pred_fallthru
          _
      $region12: #{tpu_custom_call.1} parent=5 // pred_fallthru
        _
      %p170 = scmp.lt.s32.totalorder %s16, 2
      // Predicated region
      $region21: #{tpu_custom_call.1} parent=5 // pred_check
        %p171 = pneg %p170
      $region22: #{tpu_custom_call.1} parent=5 // pred_check_branch
        %173 = sbr.rel (%p171) target = $region24
      $region23: #{tpu_custom_call.1} parent=5 // pred_region
        // Predicated region
        $region25: #{tpu_custom_call.1} parent=23 // pred_check
          %p174 = pneg %p48
        $region26: #{tpu_custom_call.1} parent=23 // pred_check_branch
          %176 = sbr.rel (%p174) target = $region28
        $region27: #{tpu_custom_call.1} parent=23 // pred_region
          %s177 = sand.u32 %s38, 1
          %s178 = scalar_lea.sflag [#allocation3], %s177
          %s179 = sand.u32 %s38, 1
          %s180 = smul.addr %s179, 272
          %s181 = scalar_lea.vmem [#allocation2], %s180
          %s183 = ssub.s32 4352, 4352
          %184 = vsyncadd %s178, %s183
          %s185 = smul.addr %s24, 68
          %s186 = smul.addr %s185, 64
          %s187 = scalar_lea.hbm %s0, %s186
          %s188 = sshll.u32 %s181, 4
          %s189 = int_to_ptr.vmem [resolvable:$true] %s188
          %194 = dma.hbm_to_vmem [thread:$0]  %s187, 4352, %s189, %s178, 128, 128, 8
        $region28: #{tpu_custom_call.1} parent=23 // pred_fallthru
          _
      $region24: #{tpu_custom_call.1} parent=5 // pred_fallthru
        _
      %p195 = scmp.le.s32.totalorder 1, %s16
      %p196 = scmp.lt.s32.totalorder %s16, 3
      %p197 = pnand %p195, %p196
      %p198 = pneg %p197
      // Predicated region
      $region29: #{tpu_custom_call.1} parent=5 // pred_check
        _
      $region30: #{tpu_custom_call.1} parent=5 // pred_check_branch
        %200 = sbr.rel (%p197) target = $region32
      $region31: #{tpu_custom_call.1} parent=5 // pred_region
        %s201 = ssub.s32 %s16, 1
        %s202 = sand.u32 %s41, 1
        %s203 = scalar_lea.sflag [#allocation3], %s202
        %s204 = sand.u32 %s41, 1
        %s205 = smul.addr %s204, 272
        %s206 = scalar_lea.vmem [#allocation2], %s205
        // Predicated region
        $region33: #{tpu_custom_call.1} parent=31 // pred_check
          %p207 = pneg %p54
        $region34: #{tpu_custom_call.1} parent=31 // pred_check_branch
          %209 = sbr.rel (%p207) target = $region36
        $region35: #{tpu_custom_call.1} parent=31 // pred_region
          %210 = dma.done %s203, 4352
        $region36: #{tpu_custom_call.1} parent=31 // pred_fallthru
          _
        // Predicated region
        $region37: #{tpu_custom_call.1} parent=31 // pred_check
          %p211 = pneg %p80
        $region38: #{tpu_custom_call.1} parent=31 // pred_check_branch
          %213 = sbr.rel (%p211) target = $region40
        $region39: #{tpu_custom_call.1} parent=31 // pred_region
          %214 = dma.done [#allocation6], 1280
        $region40: #{tpu_custom_call.1} parent=31 // pred_fallthru
          _
        %s215 = sand.u32 %s41, 1
        %s216 = scalar_lea.sflag [#allocation3], %s215
        %s217 = sand.u32 %s41, 1
        %s218 = smul.addr %s217, 272
        %s219 = scalar_lea.vmem [#allocation2], %s218
        %p220 = pneg %p54
        %p221 = pneg %p51
        %p222 = pneg %p80
        %p223 = pneg %p77
        %p224 = scmp.lt.s32.totalorder %s25, 0
        %s225 = scalar_select %p224, %s25, 0
        %s226 = scalar_lea.vmem %s2, %s225
        %p227 = pneg %p106
        %p228 = pneg %p103
        %p229 = pneg %p134
        %p230 = pneg %p131
        %s231 = sand.u32 %s121, 1
        %s232 = scalar_lea.sflag [#allocation4], %s231
        %s233 = sand.u32 %s121, 1
        %s234 = smul.addr %s233, 136
        %s235 = scalar_lea.vmem [#allocation7], %s234
        %p236 = scmp.lt.s32.totalorder %s25, 0
        %s237 = scalar_select %p236, %s25, 0
        %s238 = scalar_lea.vmem %s2, %s237
        %s239 = smul.u32 34, %s26
        %v241 = vld [vmem:[%s206] sm:$0xff]
        %v242 = vld [vmem:[%s206 + $0x8] sm:$0xff]
        %v243 = vld [vmem:[%s206 + $0x10] sm:$0xff]
        %v244 = vld [vmem:[%s206 + $0x18] sm:$0xff]
        %v245 = vld [vmem:[%s206 + $0x20] sm:$0xff]
        %v246 = vld [vmem:[%s206 + $0x28] sm:$0xff]
        %v247 = vld [vmem:[%s206 + $0x30] sm:$0xff]
        %v248 = vld [vmem:[%s206 + $0x38] sm:$0xff]
        %v249 = vld [vmem:[%s206 + $0x40] sm:$0xff]
        %v250 = vld [vmem:[%s206 + $0x48] sm:$0xff]
        %v251 = vld [vmem:[%s206 + $0x50] sm:$0xff]
        %v252 = vld [vmem:[%s206 + $0x58] sm:$0xff]
        %v253 = vld [vmem:[%s206 + $0x60] sm:$0xff]
        %v254 = vld [vmem:[%s206 + $0x68] sm:$0xff]
        %v255 = vld [vmem:[%s206 + $0x70] sm:$0xff]
        %v256 = vld [vmem:[%s206 + $0x78] sm:$0xff]
        %v257 = vld [vmem:[%s206 + $0x80] sm:$0xff]
        %v258 = vld [vmem:[%s206 + $0x88] sm:$0xff]
        %v259 = vld [vmem:[%s206 + $0x90] sm:$0xff]
        %v260 = vld [vmem:[%s206 + $0x98] sm:$0xff]
        %v261 = vld [vmem:[%s206 + $0xa0] sm:$0xff]
        %v262 = vld [vmem:[%s206 + $0xa8] sm:$0xff]
        %v263 = vld [vmem:[%s206 + $0xb0] sm:$0xff]
        %v264 = vld [vmem:[%s206 + $0xb8] sm:$0xff]
        %v265 = vld [vmem:[%s206 + $0xc0] sm:$0xff]
        %v266 = vld [vmem:[%s206 + $0xc8] sm:$0xff]
        %v267 = vld [vmem:[%s206 + $0xd0] sm:$0xff]
        %v268 = vld [vmem:[%s206 + $0xd8] sm:$0xff]
        %v269 = vld [vmem:[%s206 + $0xe0] sm:$0xff]
        %v270 = vld [vmem:[%s206 + $0xe8] sm:$0xff]
        %v271 = vld [vmem:[%s206 + $0xf0] sm:$0xff]
        %v272 = vld [vmem:[%s206 + $0xf8] sm:$0xff]
        %v273 = vld [vmem:[%s206 + $0x100] sm:$0xff]
        %v274 = vld [vmem:[%s206 + $0x108] sm:$0xff]
        %v275 = vld [vmem:[#allocation5] sm:$0xf]
        %v276 = vld [vmem:[#allocation5 + $0x4] sm:$0xf]
        %v277 = vld [vmem:[#allocation5 + $0x8] sm:$0xf]
        %v278 = vld [vmem:[#allocation5 + $0xc] sm:$0xf]
        %v279 = vld [vmem:[#allocation5 + $0x10] sm:$0xf]
        %v280 = vld [vmem:[#allocation5 + $0x14] sm:$0xf]
        %v281 = vld [vmem:[#allocation5 + $0x18] sm:$0xf]
        %v282 = vld [vmem:[#allocation5 + $0x1c] sm:$0xf]
        %v283 = vld [vmem:[#allocation5 + $0x20] sm:$0xf]
        %v284 = vld [vmem:[#allocation5 + $0x24] sm:$0xf]
        %v285 = vld [vmem:[#allocation5 + $0x28] sm:$0xf]
        %v286 = vld [vmem:[#allocation5 + $0x2c] sm:$0xf]
        %v287 = vld [vmem:[#allocation5 + $0x30] sm:$0xf]
        %v288 = vld [vmem:[#allocation5 + $0x34] sm:$0xf]
        %v289 = vld [vmem:[#allocation5 + $0x38] sm:$0xf]
        %v290 = vld [vmem:[#allocation5 + $0x3c] sm:$0xf]
        %v291 = vld [vmem:[#allocation5 + $0x40] sm:$0xf]
        %v292 = vld [vmem:[#allocation5 + $0x44] sm:$0xf]
        %v293 = vld [vmem:[#allocation5 + $0x48] sm:$0xf]
        %v294 = vld [vmem:[#allocation5 + $0x4c] sm:$0xf]
        %v295 = vld [vmem:[%s238] sm:$0x1]
        %v297 = vlaneseq
        %v298 = vshrl.u32 %v297, 7
        %v299 = vsub.s32 0, %v298
        %v300 = vrot.slane %v295, %v299
        %v336 = vunpack.c.l.b16 %v241
        %v337 = vunpack.c.h.b16 %v241
        %v338 = vunpack.c.l.b16 %v242
        %v339 = vunpack.c.h.b16 %v242
        %v340 = vunpack.c.l.b16 %v243
        %v341 = vunpack.c.h.b16 %v243
        %v342 = vunpack.c.l.b16 %v244
        %v343 = vunpack.c.h.b16 %v244
        %v344 = vunpack.c.l.b16 %v245
        %v345 = vunpack.c.h.b16 %v245
        %v346 = vunpack.c.l.b16 %v246
        %v347 = vunpack.c.h.b16 %v246
        %v348 = vunpack.c.l.b16 %v247
        %v349 = vunpack.c.h.b16 %v247
        %v350 = vunpack.c.l.b16 %v248
        %v351 = vunpack.c.h.b16 %v248
        %v352 = vunpack.c.l.b16 %v249
        %v353 = vunpack.c.h.b16 %v249
        %v354 = vunpack.c.l.b16 %v250
        %v355 = vunpack.c.h.b16 %v250
        %v356 = vunpack.c.l.b16 %v251
        %v357 = vunpack.c.h.b16 %v251
        %v358 = vunpack.c.l.b16 %v252
        %v359 = vunpack.c.h.b16 %v252
        %v360 = vunpack.c.l.b16 %v253
        %v361 = vunpack.c.h.b16 %v253
        %v362 = vunpack.c.l.b16 %v254
        %v363 = vunpack.c.h.b16 %v254
        %v364 = vunpack.c.l.b16 %v255
        %v365 = vunpack.c.h.b16 %v255
        %v366 = vunpack.c.l.b16 %v256
        %v367 = vunpack.c.h.b16 %v256
        %v368 = vunpack.c.l.b16 %v257
        %v369 = vunpack.c.h.b16 %v257
        %v370 = vunpack.c.l.b16 %v258
        %v371 = vunpack.c.h.b16 %v258
        %v372 = vunpack.c.l.b16 %v259
        %v373 = vunpack.c.h.b16 %v259
        %v374 = vunpack.c.l.b16 %v260
        %v375 = vunpack.c.h.b16 %v260
        %v376 = vunpack.c.l.b16 %v261
        %v377 = vunpack.c.h.b16 %v261
        %v378 = vunpack.c.l.b16 %v262
        %v379 = vunpack.c.h.b16 %v262
        %v380 = vunpack.c.l.b16 %v263
        %v381 = vunpack.c.h.b16 %v263
        %v382 = vunpack.c.l.b16 %v264
        %v383 = vunpack.c.h.b16 %v264
        %v384 = vunpack.c.l.b16 %v265
        %v385 = vunpack.c.h.b16 %v265
        %v386 = vunpack.c.l.b16 %v266
        %v387 = vunpack.c.h.b16 %v266
        %v388 = vunpack.c.l.b16 %v267
        %v389 = vunpack.c.h.b16 %v267
        %v390 = vunpack.c.l.b16 %v268
        %v391 = vunpack.c.h.b16 %v268
        %v392 = vunpack.c.l.b16 %v269
        %v393 = vunpack.c.h.b16 %v269
        %v394 = vunpack.c.l.b16 %v270
        %v395 = vunpack.c.h.b16 %v270
        %v396 = vunpack.c.l.b16 %v271
        %v397 = vunpack.c.h.b16 %v271
        %v398 = vunpack.c.l.b16 %v272
        %v399 = vunpack.c.h.b16 %v272
        %v400 = vunpack.c.l.b16 %v273
        %v401 = vunpack.c.h.b16 %v273
        %v402 = vunpack.c.l.b16 %v274
        %v403 = vunpack.c.h.b16 %v274
        %v404 = vpack.c.b16 %v338, %v336
        %v405 = vpack.c.b16 %v339, %v337
        %v406 = vpack.c.b16 %v342, %v340
        %v407 = vpack.c.b16 %v343, %v341
        %v408 = vpack.c.b16 %v346, %v344
        %v409 = vpack.c.b16 %v347, %v345
        %v410 = vpack.c.b16 %v350, %v348
        %v411 = vpack.c.b16 %v351, %v349
        %v412 = vpack.c.b16 %v354, %v352
        %v413 = vpack.c.b16 %v355, %v353
        %v414 = vpack.c.b16 %v358, %v356
        %v415 = vpack.c.b16 %v359, %v357
        %v416 = vpack.c.b16 %v362, %v360
        %v417 = vpack.c.b16 %v363, %v361
        %v418 = vpack.c.b16 %v366, %v364
        %v419 = vpack.c.b16 %v367, %v365
        %v420 = vpack.c.b16 %v370, %v368
        %v421 = vpack.c.b16 %v371, %v369
        %v422 = vpack.c.b16 %v374, %v372
        %v423 = vpack.c.b16 %v375, %v373
        %v424 = vpack.c.b16 %v378, %v376
        %v425 = vpack.c.b16 %v379, %v377
        %v426 = vpack.c.b16 %v382, %v380
        %v427 = vpack.c.b16 %v383, %v381
        %v428 = vpack.c.b16 %v386, %v384
        %v429 = vpack.c.b16 %v387, %v385
        %v430 = vpack.c.b16 %v390, %v388
        %v431 = vpack.c.b16 %v391, %v389
        %v432 = vpack.c.b16 %v394, %v392
        %v433 = vpack.c.b16 %v395, %v393
        %v434 = vpack.c.b16 %v398, %v396
        %v435 = vpack.c.b16 %v399, %v397
        %v436 = vpack.c.b16 %v402, %v400
        %v437 = vpack.c.b16 %v403, %v401
        %v475 = vunpack.c.l.b16 %v275
        %v476 = vunpack.c.l.b16 %v276
        %v477 = vunpack.c.l.b16 %v277
        %v478 = vunpack.c.l.b16 %v278
        %v479 = vunpack.c.l.b16 %v279
        %v480 = vunpack.c.l.b16 %v280
        %v481 = vunpack.c.l.b16 %v281
        %v482 = vunpack.c.l.b16 %v282
        %v483 = vunpack.c.l.b16 %v283
        %v484 = vunpack.c.l.b16 %v284
        %v485 = vunpack.c.l.b16 %v285
        %v486 = vunpack.c.l.b16 %v286
        %v487 = vunpack.c.l.b16 %v287
        %v488 = vunpack.c.l.b16 %v288
        %v489 = vunpack.c.l.b16 %v289
        %v490 = vunpack.c.l.b16 %v290
        %v491 = vunpack.c.l.b16 %v291
        %v492 = vunpack.c.l.b16 %v292
        %v493 = vunpack.c.l.b16 %v293
        %v494 = vunpack.c.l.b16 %v294
        %v495 = vpack.c.b16 %v476, %v475
        %v496 = vpack.c.b16 %v478, %v477
        %v497 = vpack.c.b16 %v480, %v479
        %v498 = vpack.c.b16 %v482, %v481
        %v499 = vpack.c.b16 %v484, %v483
        %v500 = vpack.c.b16 %v486, %v485
        %v501 = vpack.c.b16 %v488, %v487
        %v502 = vpack.c.b16 %v490, %v489
        %v503 = vpack.c.b16 %v492, %v491
        %v504 = vpack.c.b16 %v494, %v493
        %vm515 = vcmask 261120
        %v517 = vsel %vm515, %v405, 0
        %v520 = vsel %vm515, %v407, 0
        %v523 = vsel %vm515, %v409, 0
        %v526 = vsel %vm515, %v411, 0
        %v529 = vsel %vm515, %v413, 0
        %v532 = vsel %vm515, %v415, 0
        %v535 = vsel %vm515, %v417, 0
        %v538 = vsel %vm515, %v419, 0
        %v541 = vsel %vm515, %v421, 0
        %v544 = vsel %vm515, %v423, 0
        %v547 = vsel %vm515, %v425, 0
        %v550 = vsel %vm515, %v427, 0
        %v553 = vsel %vm515, %v429, 0
        %v556 = vsel %vm515, %v431, 0
        %v559 = vsel %vm515, %v433, 0
        %v562 = vsel %vm515, %v435, 0
        %v565 = vsel %vm515, %v437, 0
        %567 = vmatprep.subr.bf16.mxu0 0
        %568 = vmatpush1.bf16.msra.mxu0 %v502
        %569 = vmatprep.subr.bf16.mxu0 0
        %570 = vmatpush1.bf16.msra.mxu0 %v501
        %571 = vmatprep.subr.bf16.mxu0 0
        %572 = vmatpush1.bf16.msra.mxu0 %v500
        %573 = vmatprep.subr.bf16.mxu0 0
        %574 = vmatpush1.bf16.msra.mxu0 %v499
        %575 = vmatprep.subr.bf16.mxu0 0
        %576 = vmatpush1.bf16.msra.mxu0 %v498
        %577 = vmatprep.subr.bf16.mxu0 0
        %578 = vmatpush1.bf16.msra.mxu0 %v497
        %579 = vmatprep.subr.bf16.mxu0 0
        %580 = vmatpush1.bf16.msra.mxu0 %v496
        %581 = vmatprep.subr.bf16.mxu0 0
        %582 = vmatpush1.bf16.msra.mxu0 %v495
        %583 = vmatprep.subr.bf16.mxu0 0
        %584 = vmatpush2.bf16.msra.mxu0 0
        %585 = vmatprep.subr.bf16.mxu0 0
        %586 = vmatpush2.bf16.msra.mxu0 0
        %587 = vmatprep.subr.bf16.mxu0 0
        %588 = vmatpush2.bf16.msra.mxu0 0
        %589 = vmatprep.subr.bf16.mxu0 0
        %590 = vmatpush2.bf16.msra.mxu0 0
        %591 = vmatprep.subr.bf16.mxu0 0
        %592 = vmatpush2.bf16.msra.mxu0 0
        %593 = vmatprep.subr.bf16.mxu0 0
        %594 = vmatpush2.bf16.msra.mxu0 0
        %595 = vmatprep.subr.bf16.mxu0 0
        %596 = vmatpush2.bf16.msra.mxu0 %v504
        %597 = vmatprep.subr.bf16.mxu0 0
        %598 = vmatpush2.bf16.msra.mxu0 %v503
        %599 = vmatprep.mubr.bf16.mxu0 %v517
        %600 = vmatmul.mubr.bf16.gmra.mxu0 %v404
        %v601 = vpop.f32.mrf.mxu0
        %v602 = vadd.f32 %v300, %v601
        %v603 = vpop.f32.mrf.mxu0
        %v604 = vpop.f32.mrf.mxu0
        %v605 = vadd.f32 %v300, %v604
        %v606 = vpop.f32.mrf.mxu0
        %607 = vmatprep.mubr.bf16.mxu0 %v520
        %608 = vmatmul.mubr.bf16.gmra.mxu0 %v406
        %v609 = vpop.f32.mrf.mxu0
        %v610 = vadd.f32 %v300, %v609
        %v611 = vpop.f32.mrf.mxu0
        %v612 = vpop.f32.mrf.mxu0
        %v613 = vadd.f32 %v300, %v612
        %v614 = vpop.f32.mrf.mxu0
        %615 = vmatprep.mubr.bf16.mxu0 %v523
        %616 = vmatmul.mubr.bf16.gmra.mxu0 %v408
        %v617 = vpop.f32.mrf.mxu0
        %v618 = vadd.f32 %v300, %v617
        %v619 = vpop.f32.mrf.mxu0
        %v620 = vpop.f32.mrf.mxu0
        %v621 = vadd.f32 %v300, %v620
        %v622 = vpop.f32.mrf.mxu0
        %623 = vmatprep.mubr.bf16.mxu0 %v526
        %624 = vmatmul.mubr.bf16.gmra.mxu0 %v410
        %v625 = vpop.f32.mrf.mxu0
        %v626 = vadd.f32 %v300, %v625
        %v627 = vpop.f32.mrf.mxu0
        %v628 = vpop.f32.mrf.mxu0
        %v629 = vadd.f32 %v300, %v628
        %v630 = vpop.f32.mrf.mxu0
        %631 = vmatprep.mubr.bf16.mxu0 %v529
        %632 = vmatmul.mubr.bf16.gmra.mxu0 %v412
        %v633 = vpop.f32.mrf.mxu0
        %v634 = vadd.f32 %v300, %v633
        %v635 = vpop.f32.mrf.mxu0
        %v636 = vpop.f32.mrf.mxu0
        %v637 = vadd.f32 %v300, %v636
        %v638 = vpop.f32.mrf.mxu0
        %639 = vmatprep.mubr.bf16.mxu0 %v532
        %640 = vmatmul.mubr.bf16.gmra.mxu0 %v414
        %v641 = vpop.f32.mrf.mxu0
        %v642 = vadd.f32 %v300, %v641
        %v643 = vpop.f32.mrf.mxu0
        %v644 = vpop.f32.mrf.mxu0
        %v645 = vadd.f32 %v300, %v644
        %v646 = vpop.f32.mrf.mxu0
        %647 = vmatprep.mubr.bf16.mxu0 %v535
        %648 = vmatmul.mubr.bf16.gmra.mxu0 %v416
        %v649 = vpop.f32.mrf.mxu0
        %v650 = vadd.f32 %v300, %v649
        %v651 = vpop.f32.mrf.mxu0
        %v652 = vpop.f32.mrf.mxu0
        %v653 = vadd.f32 %v300, %v652
        %v654 = vpop.f32.mrf.mxu0
        %655 = vmatprep.mubr.bf16.mxu0 %v538
        %656 = vmatmul.mubr.bf16.gmra.mxu0 %v418
        %v657 = vpop.f32.mrf.mxu0
        %v658 = vadd.f32 %v300, %v657
        %v659 = vpop.f32.mrf.mxu0
        %v660 = vpop.f32.mrf.mxu0
        %v661 = vadd.f32 %v300, %v660
        %v662 = vpop.f32.mrf.mxu0
        %663 = vmatprep.mubr.bf16.mxu0 %v541
        %664 = vmatmul.mubr.bf16.gmra.mxu0 %v420
        %v665 = vpop.f32.mrf.mxu0
        %v666 = vadd.f32 %v300, %v665
        %v667 = vpop.f32.mrf.mxu0
        %v668 = vpop.f32.mrf.mxu0
        %v669 = vadd.f32 %v300, %v668
        %v670 = vpop.f32.mrf.mxu0
        %671 = vmatprep.mubr.bf16.mxu0 %v544
        %672 = vmatmul.mubr.bf16.gmra.mxu0 %v422
        %v673 = vpop.f32.mrf.mxu0
        %v674 = vadd.f32 %v300, %v673
        %v675 = vpop.f32.mrf.mxu0
        %v676 = vpop.f32.mrf.mxu0
        %v677 = vadd.f32 %v300, %v676
        %v678 = vpop.f32.mrf.mxu0
        %679 = vmatprep.mubr.bf16.mxu0 %v547
        %680 = vmatmul.mubr.bf16.gmra.mxu0 %v424
        %v681 = vpop.f32.mrf.mxu0
        %v682 = vadd.f32 %v300, %v681
        %v683 = vpop.f32.mrf.mxu0
        %v684 = vpop.f32.mrf.mxu0
        %v685 = vadd.f32 %v300, %v684
        %v686 = vpop.f32.mrf.mxu0
        %687 = vmatprep.mubr.bf16.mxu0 %v550
        %688 = vmatmul.mubr.bf16.gmra.mxu0 %v426
        %v689 = vpop.f32.mrf.mxu0
        %v690 = vadd.f32 %v300, %v689
        %v691 = vpop.f32.mrf.mxu0
        %v692 = vpop.f32.mrf.mxu0
        %v693 = vadd.f32 %v300, %v692
        %v694 = vpop.f32.mrf.mxu0
        %695 = vmatprep.mubr.bf16.mxu0 %v553
        %696 = vmatmul.mubr.bf16.gmra.mxu0 %v428
        %v697 = vpop.f32.mrf.mxu0
        %v698 = vadd.f32 %v300, %v697
        %v699 = vpop.f32.mrf.mxu0
        %v700 = vpop.f32.mrf.mxu0
        %v701 = vadd.f32 %v300, %v700
        %v702 = vpop.f32.mrf.mxu0
        %703 = vmatprep.mubr.bf16.mxu0 %v556
        %704 = vmatmul.mubr.bf16.gmra.mxu0 %v430
        %v705 = vpop.f32.mrf.mxu0
        %v706 = vadd.f32 %v300, %v705
        %v707 = vpop.f32.mrf.mxu0
        %v708 = vpop.f32.mrf.mxu0
        %v709 = vadd.f32 %v300, %v708
        %v710 = vpop.f32.mrf.mxu0
        %711 = vmatprep.mubr.bf16.mxu0 %v559
        %712 = vmatmul.mubr.bf16.gmra.mxu0 %v432
        %v713 = vpop.f32.mrf.mxu0
        %v714 = vadd.f32 %v300, %v713
        %v715 = vpop.f32.mrf.mxu0
        %v716 = vpop.f32.mrf.mxu0
        %v717 = vadd.f32 %v300, %v716
        %v718 = vpop.f32.mrf.mxu0
        %719 = vmatprep.mubr.bf16.mxu0 %v562
        %720 = vmatmul.mubr.bf16.gmra.mxu0 %v434
        %v721 = vpop.f32.mrf.mxu0
        %v722 = vadd.f32 %v300, %v721
        %v723 = vpop.f32.mrf.mxu0
        %v724 = vpop.f32.mrf.mxu0
        %v725 = vadd.f32 %v300, %v724
        %v726 = vpop.f32.mrf.mxu0
        %727 = vmatprep.mubr.bf16.mxu0 %v565
        %728 = vmatmul.mubr.bf16.gmra.mxu0 %v436
        %v729 = vpop.f32.mrf.mxu0
        %v730 = vadd.f32 %v300, %v729
        %v731 = vpop.f32.mrf.mxu0
        %v732 = vpop.f32.mrf.mxu0
        %v733 = vadd.f32 %v300, %v732
        %v734 = vpop.f32.mrf.mxu0
        %735 = vdwg.mxu0
        %vm736 = vcmp.gt.f32.partialorder %v602, 0.0
        %vm737 = vcmp.gt.f32.partialorder %v605, 0.0
        %vm738 = vcmp.gt.f32.partialorder %v610, 0.0
        %vm739 = vcmp.gt.f32.partialorder %v613, 0.0
        %vm740 = vcmp.gt.f32.partialorder %v618, 0.0
        %vm741 = vcmp.gt.f32.partialorder %v621, 0.0
        %vm742 = vcmp.gt.f32.partialorder %v626, 0.0
        %vm743 = vcmp.gt.f32.partialorder %v629, 0.0
        %vm744 = vcmp.gt.f32.partialorder %v634, 0.0
        %vm745 = vcmp.gt.f32.partialorder %v637, 0.0
        %vm746 = vcmp.gt.f32.partialorder %v642, 0.0
        %vm747 = vcmp.gt.f32.partialorder %v645, 0.0
        %vm748 = vcmp.gt.f32.partialorder %v650, 0.0
        %vm749 = vcmp.gt.f32.partialorder %v653, 0.0
        %vm750 = vcmp.gt.f32.partialorder %v658, 0.0
        %vm751 = vcmp.gt.f32.partialorder %v661, 0.0
        %vm752 = vcmp.gt.f32.partialorder %v666, 0.0
        %vm753 = vcmp.gt.f32.partialorder %v669, 0.0
        %vm754 = vcmp.gt.f32.partialorder %v674, 0.0
        %vm755 = vcmp.gt.f32.partialorder %v677, 0.0
        %vm756 = vcmp.gt.f32.partialorder %v682, 0.0
        %vm757 = vcmp.gt.f32.partialorder %v685, 0.0
        %vm758 = vcmp.gt.f32.partialorder %v690, 0.0
        %vm759 = vcmp.gt.f32.partialorder %v693, 0.0
        %vm760 = vcmp.gt.f32.partialorder %v698, 0.0
        %vm761 = vcmp.gt.f32.partialorder %v701, 0.0
        %vm762 = vcmp.gt.f32.partialorder %v706, 0.0
        %vm763 = vcmp.gt.f32.partialorder %v709, 0.0
        %vm764 = vcmp.gt.f32.partialorder %v714, 0.0
        %vm765 = vcmp.gt.f32.partialorder %v717, 0.0
        %vm766 = vcmp.gt.f32.partialorder %v722, 0.0
        %vm767 = vcmp.gt.f32.partialorder %v725, 0.0
        %vm768 = vcmp.gt.f32.partialorder %v730, 0.0
        %vm769 = vcmp.gt.f32.partialorder %v733, 0.0
        %v770 = vmul.f32 %v602, 0.2
        %v771 = vmul.f32 %v605, 0.2
        %v772 = vmul.f32 %v610, 0.2
        %v773 = vmul.f32 %v613, 0.2
        %v774 = vmul.f32 %v618, 0.2
        %v775 = vmul.f32 %v621, 0.2
        %v776 = vmul.f32 %v626, 0.2
        %v777 = vmul.f32 %v629, 0.2
        %v778 = vmul.f32 %v634, 0.2
        %v779 = vmul.f32 %v637, 0.2
        %v780 = vmul.f32 %v642, 0.2
        %v781 = vmul.f32 %v645, 0.2
        %v782 = vmul.f32 %v650, 0.2
        %v783 = vmul.f32 %v653, 0.2
        %v784 = vmul.f32 %v658, 0.2
        %v785 = vmul.f32 %v661, 0.2
        %v786 = vmul.f32 %v666, 0.2
        %v787 = vmul.f32 %v669, 0.2
        %v788 = vmul.f32 %v674, 0.2
        %v789 = vmul.f32 %v677, 0.2
        %v790 = vmul.f32 %v682, 0.2
        %v791 = vmul.f32 %v685, 0.2
        %v792 = vmul.f32 %v690, 0.2
        %v793 = vmul.f32 %v693, 0.2
        %v794 = vmul.f32 %v698, 0.2
        %v795 = vmul.f32 %v701, 0.2
        %v796 = vmul.f32 %v706, 0.2
        %v797 = vmul.f32 %v709, 0.2
        %v798 = vmul.f32 %v714, 0.2
        %v799 = vmul.f32 %v717, 0.2
        %v800 = vmul.f32 %v722, 0.2
        %v801 = vmul.f32 %v725, 0.2
        %v802 = vmul.f32 %v730, 0.2
        %v803 = vmul.f32 %v733, 0.2
        %v804 = vsel %vm736, %v602, %v770
        %v805 = vsel %vm737, %v605, %v771
        %v806 = vsel %vm738, %v610, %v772
        %v807 = vsel %vm739, %v613, %v773
        %v808 = vsel %vm740, %v618, %v774
        %v809 = vsel %vm741, %v621, %v775
        %v810 = vsel %vm742, %v626, %v776
        %v811 = vsel %vm743, %v629, %v777
        %v812 = vsel %vm744, %v634, %v778
        %v813 = vsel %vm745, %v637, %v779
        %v814 = vsel %vm746, %v642, %v780
        %v815 = vsel %vm747, %v645, %v781
        %v816 = vsel %vm748, %v650, %v782
        %v817 = vsel %vm749, %v653, %v783
        %v818 = vsel %vm750, %v658, %v784
        %v819 = vsel %vm751, %v661, %v785
        %v820 = vsel %vm752, %v666, %v786
        %v821 = vsel %vm753, %v669, %v787
        %v822 = vsel %vm754, %v674, %v788
        %v823 = vsel %vm755, %v677, %v789
        %v824 = vsel %vm756, %v682, %v790
        %v825 = vsel %vm757, %v685, %v791
        %v826 = vsel %vm758, %v690, %v792
        %v827 = vsel %vm759, %v693, %v793
        %v828 = vsel %vm760, %v698, %v794
        %v829 = vsel %vm761, %v701, %v795
        %v830 = vsel %vm762, %v706, %v796
        %v831 = vsel %vm763, %v709, %v797
        %v832 = vsel %vm764, %v714, %v798
        %v833 = vsel %vm765, %v717, %v799
        %v834 = vsel %vm766, %v722, %v800
        %v835 = vsel %vm767, %v725, %v801
        %v836 = vsel %vm768, %v730, %v802
        %v837 = vsel %vm769, %v733, %v803
        %v838 = vpack.c.bf16 %v805, %v804
        %v839 = vpack.c.bf16 %v807, %v806
        %v840 = vpack.c.bf16 %v809, %v808
        %v841 = vpack.c.bf16 %v811, %v810
        %v842 = vpack.c.bf16 %v813, %v812
        %v843 = vpack.c.bf16 %v815, %v814
        %v844 = vpack.c.bf16 %v817, %v816
        %v845 = vpack.c.bf16 %v819, %v818
        %v846 = vpack.c.bf16 %v821, %v820
        %v847 = vpack.c.bf16 %v823, %v822
        %v848 = vpack.c.bf16 %v825, %v824
        %v849 = vpack.c.bf16 %v827, %v826
        %v850 = vpack.c.bf16 %v829, %v828
        %v851 = vpack.c.bf16 %v831, %v830
        %v852 = vpack.c.bf16 %v833, %v832
        %v853 = vpack.c.bf16 %v835, %v834
        %v854 = vpack.c.bf16 %v837, %v836
        %v872 = vunpack.c.l.b16 %v838
        %v873 = vunpack.c.h.b16 %v838
        %v874 = vunpack.c.l.b16 %v839
        %v875 = vunpack.c.h.b16 %v839
        %v876 = vunpack.c.l.b16 %v840
        %v877 = vunpack.c.h.b16 %v840
        %v878 = vunpack.c.l.b16 %v841
        %v879 = vunpack.c.h.b16 %v841
        %v880 = vunpack.c.l.b16 %v842
        %v881 = vunpack.c.h.b16 %v842
        %v882 = vunpack.c.l.b16 %v843
        %v883 = vunpack.c.h.b16 %v843
        %v884 = vunpack.c.l.b16 %v844
        %v885 = vunpack.c.h.b16 %v844
        %v886 = vunpack.c.l.b16 %v845
        %v887 = vunpack.c.h.b16 %v845
        %v888 = vunpack.c.l.b16 %v846
        %v889 = vunpack.c.h.b16 %v846
        %v890 = vunpack.c.l.b16 %v847
        %v891 = vunpack.c.h.b16 %v847
        %v892 = vunpack.c.l.b16 %v848
        %v893 = vunpack.c.h.b16 %v848
        %v894 = vunpack.c.l.b16 %v849
        %v895 = vunpack.c.h.b16 %v849
        %v896 = vunpack.c.l.b16 %v850
        %v897 = vunpack.c.h.b16 %v850
        %v898 = vunpack.c.l.b16 %v851
        %v899 = vunpack.c.h.b16 %v851
        %v900 = vunpack.c.l.b16 %v852
        %v901 = vunpack.c.h.b16 %v852
        %v902 = vunpack.c.l.b16 %v853
        %v903 = vunpack.c.h.b16 %v853
        %v904 = vunpack.c.l.b16 %v854
        %v905 = vunpack.c.h.b16 %v854
        %v906 = vpack.c.b16 %v872, %v872
        %v907 = vpack.c.b16 %v873, %v873
        %v908 = vpack.c.b16 %v874, %v874
        %v909 = vpack.c.b16 %v875, %v875
        %v910 = vpack.c.b16 %v876, %v876
        %v911 = vpack.c.b16 %v877, %v877
        %v912 = vpack.c.b16 %v878, %v878
        %v913 = vpack.c.b16 %v879, %v879
        %v914 = vpack.c.b16 %v880, %v880
        %v915 = vpack.c.b16 %v881, %v881
        %v916 = vpack.c.b16 %v882, %v882
        %v917 = vpack.c.b16 %v883, %v883
        %v918 = vpack.c.b16 %v884, %v884
        %v919 = vpack.c.b16 %v885, %v885
        %v920 = vpack.c.b16 %v886, %v886
        %v921 = vpack.c.b16 %v887, %v887
        %v922 = vpack.c.b16 %v888, %v888
        %v923 = vpack.c.b16 %v889, %v889
        %v924 = vpack.c.b16 %v890, %v890
        %v925 = vpack.c.b16 %v891, %v891
        %v926 = vpack.c.b16 %v892, %v892
        %v927 = vpack.c.b16 %v893, %v893
        %v928 = vpack.c.b16 %v894, %v894
        %v929 = vpack.c.b16 %v895, %v895
        %v930 = vpack.c.b16 %v896, %v896
        %v931 = vpack.c.b16 %v897, %v897
        %v932 = vpack.c.b16 %v898, %v898
        %v933 = vpack.c.b16 %v899, %v899
        %v934 = vpack.c.b16 %v900, %v900
        %v935 = vpack.c.b16 %v901, %v901
        %v936 = vpack.c.b16 %v902, %v902
        %v937 = vpack.c.b16 %v903, %v903
        %v938 = vpack.c.b16 %v904, %v904
        %v939 = vpack.c.b16 %v905, %v905
        %974 = vst [vmem:[%s235] sm:$0xf] %v906
        %975 = vst [vmem:[%s235 + $0x4] sm:$0xf] %v907
        %976 = vst [vmem:[%s235 + $0x8] sm:$0xf] %v908
        %977 = vst [vmem:[%s235 + $0xc] sm:$0xf] %v909
        %978 = vst [vmem:[%s235 + $0x10] sm:$0xf] %v910
        %979 = vst [vmem:[%s235 + $0x14] sm:$0xf] %v911
        %980 = vst [vmem:[%s235 + $0x18] sm:$0xf] %v912
        %981 = vst [vmem:[%s235 + $0x1c] sm:$0xf] %v913
        %982 = vst [vmem:[%s235 + $0x20] sm:$0xf] %v914
        %983 = vst [vmem:[%s235 + $0x24] sm:$0xf] %v915
        %984 = vst [vmem:[%s235 + $0x28] sm:$0xf] %v916
        %985 = vst [vmem:[%s235 + $0x2c] sm:$0xf] %v917
        %986 = vst [vmem:[%s235 + $0x30] sm:$0xf] %v918
        %987 = vst [vmem:[%s235 + $0x34] sm:$0xf] %v919
        %988 = vst [vmem:[%s235 + $0x38] sm:$0xf] %v920
        %989 = vst [vmem:[%s235 + $0x3c] sm:$0xf] %v921
        %990 = vst [vmem:[%s235 + $0x40] sm:$0xf] %v922
        %991 = vst [vmem:[%s235 + $0x44] sm:$0xf] %v923
        %992 = vst [vmem:[%s235 + $0x48] sm:$0xf] %v924
        %993 = vst [vmem:[%s235 + $0x4c] sm:$0xf] %v925
        %994 = vst [vmem:[%s235 + $0x50] sm:$0xf] %v926
        %995 = vst [vmem:[%s235 + $0x54] sm:$0xf] %v927
        %996 = vst [vmem:[%s235 + $0x58] sm:$0xf] %v928
        %997 = vst [vmem:[%s235 + $0x5c] sm:$0xf] %v929
        %998 = vst [vmem:[%s235 + $0x60] sm:$0xf] %v930
        %999 = vst [vmem:[%s235 + $0x64] sm:$0xf] %v931
        %1000 = vst [vmem:[%s235 + $0x68] sm:$0xf] %v932
        %1001 = vst [vmem:[%s235 + $0x6c] sm:$0xf] %v933
        %1002 = vst [vmem:[%s235 + $0x70] sm:$0xf] %v934
        %1003 = vst [vmem:[%s235 + $0x74] sm:$0xf] %v935
        %1004 = vst [vmem:[%s235 + $0x78] sm:$0xf] %v936
        %1005 = vst [vmem:[%s235 + $0x7c] sm:$0xf] %v937
        %1006 = vst [vmem:[%s235 + $0x80] sm:$0xf] %v938
        %1007 = vst [vmem:[%s235 + $0x84] sm:$0xf] %v939
        %s1008 = sand.u32 %s121, 1
        %s1009 = scalar_lea.sflag [#allocation4], %s1008
        %s1010 = sand.u32 %s121, 1
        %s1011 = smul.addr %s1010, 136
        %s1012 = scalar_lea.vmem [#allocation7], %s1011
        // Predicated region
        $region41: #{tpu_custom_call.1} parent=31 // pred_check
          %p1013 = pneg %p131
        $region42: #{tpu_custom_call.1} parent=31 // pred_check_branch
          %1015 = sbr.rel (%p1013) target = $region44
        $region43: #{tpu_custom_call.1} parent=31 // pred_region
          %s1016 = smul.u32 34, %s26
          %s1018 = ssub.s32 2176, 2176
          %1019 = vsyncadd %s1009, %s1018
          %s1020 = sadd.s32 %s25, %s1016
          %s1021 = smul.addr %s1020, 64
          %s1022 = scalar_lea.hbm %s3, %s1021
          %s1023 = sshll.u32 %s1012, 4
          %s1024 = int_to_ptr.vmem [resolvable:$true] %s1023
          %1029 = dma.vmem_to_hbm [thread:$0]  %s1024, 2176, %s1022, %s1009, 64, 64, 4
        $region44: #{tpu_custom_call.1} parent=31 // pred_fallthru
          _
      $region32: #{tpu_custom_call.1} parent=5 // pred_fallthru
        _
      %p1030 = scmp.le.s32.totalorder 2, %s16
      // Predicated region
      $region45: #{tpu_custom_call.1} parent=5 // pred_check
        %p1031 = pneg %p1030
      $region46: #{tpu_custom_call.1} parent=5 // pred_check_branch
        %1033 = sbr.rel (%p1031) target = $region48
      $region47: #{tpu_custom_call.1} parent=5 // pred_region
        %s1034 = ssub.s32 %s16, 2
        // Predicated region
        $region49: #{tpu_custom_call.1} parent=47 // pred_check
          %p1035 = pneg %p137
        $region50: #{tpu_custom_call.1} parent=47 // pred_check_branch
          %1037 = sbr.rel (%p1035) target = $region52
        $region51: #{tpu_custom_call.1} parent=47 // pred_region
          %s1038 = sand.u32 %s122, 1
          %s1039 = scalar_lea.sflag [#allocation4], %s1038
          %s1040 = sand.u32 %s122, 1
          %s1041 = smul.addr %s1040, 136
          %s1042 = scalar_lea.vmem [#allocation7], %s1041
          %1043 = dma.done %s1039, 2176
        $region52: #{tpu_custom_call.1} parent=47 // pred_fallthru
          _
      $region48: #{tpu_custom_call.1} parent=5 // pred_fallthru
        _
    $region6: #{tpu_custom_call.1} parent=1 // loop_footer
      %s20 = sadd.s32 1, %s16
    $region7: #{tpu_custom_call.1} parent=1 // loop_footer_branch
      %15 = sbr.rel target = $region3
    $region8: #{tpu_custom_call.1} parent=1 // loop_exit
      _
    %1044 = vsyncpa [#allocation3], 1
    %s1045 = scalar_lea.sflag [#allocation3], 1
    %1046 = vsyncpa %s1045, 1
    %1047 = vsyncpa [#allocation6], 1
    %1048 = vsyncpa [#allocation4], 1
    %s1049 = scalar_lea.sflag [#allocation4], 1
    %1050 = vsyncpa %s1049, 1

</llo_original>
